<compile_context>
chip_gen: v7x
topology: tpu7x:2x2x1
jax: 0.10.0
libtpu: 0.0.40
codegen_flags: <defaults>
</compile_context>

<pallas_src>
import functools

import numpy as np
import jax
import jax.numpy as jnp
from jax import lax
from jax.experimental import pallas as pl
from jax.experimental.pallas import tpu as pltpu

HARTREE2KCAL = 627.5095
LANES = 128


def _round_up(x, m):
    return ((x + m - 1) // m) * m


def _energy_kernel(out_ref, exc_ref, w_ref, rho_ref, k_ref, dm_ref,
                   e_ref, acc_ref):
    """Per-molecule energy e_b = sum_g (out+exc)*w*rho - 0.25 * tr(k @ dm)."""
    g = pl.program_id(1)
    bt = acc_ref.shape[0]

    # --- init (first G block): fold in the exchange term -0.25 * tr(k @ dm).
    @pl.when(g == 0)
    def _init():
        sub = lax.broadcasted_iota(jnp.int32, (bt, 1), 0)
        ev_col = jnp.zeros((bt, 1), jnp.float32)
        # Static unroll over the small per-block batch; each step is one 2-D
        # XLU transpose + VPU multiply + reduce (hidden under DMA).
        # trace(k @ dm) == sum(k * dm.T).
        for b in range(bt):
            tr_b = jnp.sum(k_ref[b] * dm_ref[b].T)
            ev_col = ev_col + jnp.where(sub == b, tr_b, jnp.float32(0.0))
        acc_ref[...] = jnp.float32(-0.25) * ev_col

    # --- per-G-block partial of s1 = sum_g (out + exc) * w * rho.
    s1 = jnp.sum((out_ref[...] + exc_ref[...]) * w_ref[...] * rho_ref[...],
                 axis=-1, keepdims=True)                    # (bt, 1)
    acc_ref[...] += s1

    # --- finalize (last G block): lane-dense store; epilogue reads lane 0.
    @pl.when(g == pl.num_programs(1) - 1)
    def _fin():
        e_ref[...] = jnp.broadcast_to(acc_ref[...], e_ref.shape)


@functools.partial(jax.jit, static_argnames=("bt", "gt"))
def custom_mse_loss(output, myexc, g_weights, rho0, myk, mydm,
                    e1, ecoul, enuc, target, *, bt=8, gt=512):
    output = output.astype(jnp.float32)
    myexc = myexc.astype(jnp.float32)
    g_weights = g_weights.astype(jnp.float32)
    rho0 = rho0.astype(jnp.float32)
    myk = myk.astype(jnp.float32)
    mydm = mydm.astype(jnp.float32)

    B, G = output.shape
    N = myk.shape[-1]

    bt = min(bt, _round_up(B, 8))          # multiple of 8 (f32 sublanes)
    gt = min(gt, _round_up(G, LANES))      # multiple of 128 (lanes)
    Bp = _round_up(B, bt)
    Gp = _round_up(G, gt)

    # Zero-pad only when shapes are unaligned (costs one copy; padded
    # molecules / grid points contribute exactly 0 to the energies).
    if (Bp, Gp) != (B, G):
        output = jnp.pad(output, ((0, Bp - B), (0, Gp - G)))
        myexc = jnp.pad(myexc, ((0, Bp - B), (0, Gp - G)))
        g_weights = jnp.pad(g_weights, ((0, Bp - B), (0, Gp - G)))
        rho0 = jnp.pad(rho0, ((0, Bp - B), (0, Gp - G)))
    if Bp != B:
        myk = jnp.pad(myk, ((0, Bp - B), (0, 0), (0, 0)))
        mydm = jnp.pad(mydm, ((0, Bp - B), (0, 0), (0, 0)))

    grid = (Bp // bt, Gp // gt)

    flops = Bp * (4 * Gp + 2 * N * N)
    bytes_accessed = 4 * (4 * Bp * Gp + 2 * Bp * N * N + Bp * LANES)
    vmem_bytes = 2 * 4 * (4 * bt * gt + 2 * bt * N * N + bt * LANES) + 4 * bt
    vmem_limit = int(min(max(4 * vmem_bytes, 16 * 1024 * 1024),
                         48 * 1024 * 1024))

    energies = pl.pallas_call(
        _energy_kernel,
        out_shape=jax.ShapeDtypeStruct((Bp, LANES), jnp.float32),
        grid_spec=pltpu.PrefetchScalarGridSpec(
            num_scalar_prefetch=0,
            grid=grid,
            in_specs=[
                pl.BlockSpec((bt, gt), lambda b, g: (b, g)),       # output
                pl.BlockSpec((bt, gt), lambda b, g: (b, g)),       # myexc
                pl.BlockSpec((bt, gt), lambda b, g: (b, g)),       # g_weights
                pl.BlockSpec((bt, gt), lambda b, g: (b, g)),       # rho0
                pl.BlockSpec((bt, N, N), lambda b, g: (b, 0, 0)),  # myk
                pl.BlockSpec((bt, N, N), lambda b, g: (b, 0, 0)),  # mydm
            ],
            out_specs=pl.BlockSpec((bt, LANES), lambda b, g: (b, 0)),
            scratch_shapes=[pltpu.VMEM((bt, 1), jnp.float32)],
        ),
        compiler_params=pltpu.CompilerParams(
            dimension_semantics=("parallel", "arbitrary"),
            vmem_limit_bytes=vmem_limit,
        ),
        cost_estimate=pl.CostEstimate(
            flops=flops, transcendentals=0, bytes_accessed=bytes_accessed),
    )(output, myexc, g_weights, rho0, myk, mydm)

    # Tiny O(B) XLA epilogue: per-molecule scalar energies, abs, mean.
    e_mol = energies[:B, 0]
    mytot = (e_mol + ecoul.astype(jnp.float32) + e1.astype(jnp.float32)
             + enuc.astype(jnp.float32)) * jnp.float32(HARTREE2KCAL)
    loss = jnp.abs(mytot - target.astype(jnp.float32))
    return (jnp.float32(1e-10) + jnp.sum(loss)) / B


def _reference(output, myexc, g_weights, rho0, myk, mydm, e1, ecoul, enuc,
               target):
    output = np.asarray(output, np.float64)
    myexc = np.asarray(myexc, np.float64)
    g_weights = np.asarray(g_weights, np.float64)
    rho0 = np.asarray(rho0, np.float64)
    myk = np.asarray(myk, np.float64)
    mydm = np.asarray(mydm, np.float64)
    e1 = np.asarray(e1, np.float64)
    ecoul = np.asarray(ecoul, np.float64)
    enuc = np.asarray(enuc, np.float64)
    target = np.asarray(target, np.float64)
    B = output.shape[0]
    t = 1e-10
    for i in range(B):
        s1 = np.sum((output[i] + myexc[i]) * g_weights[i] * rho0[i])
        ev = 0.25 * np.einsum('ij,ji->', myk[i], mydm[i])
        mytot = (s1 - ev + ecoul[i] + e1[i] + enuc[i]) * HARTREE2KCAL
        t += abs(mytot - target[i])
    return t / B


if __name__ == "__main__":
    B, G, N = 16, 1024, 128    # molecules, grid points, basis functions

    key = jax.random.PRNGKey(0)
    ks = jax.random.split(key, 10)
    output = jax.random.normal(ks[0], (B, G), dtype=jnp.float32) * 0.01
    myexc = jax.random.normal(ks[1], (B, G), dtype=jnp.float32) * 0.01
    g_weights = jax.random.uniform(ks[2], (B, G), dtype=jnp.float32)
    rho0 = jax.random.uniform(ks[3], (B, G), dtype=jnp.float32)
    myk = jax.random.normal(ks[4], (B, N, N), dtype=jnp.float32) * 0.01
    mydm = jax.random.normal(ks[5], (B, N, N), dtype=jnp.float32) * 0.01
    e1 = jax.random.normal(ks[6], (B,), dtype=jnp.float32)
    ecoul = jax.random.normal(ks[7], (B,), dtype=jnp.float32)
    enuc = jax.random.normal(ks[8], (B,), dtype=jnp.float32)
    target = jax.random.normal(ks[9], (B,), dtype=jnp.float32)

    tloss = custom_mse_loss(output, myexc, g_weights, rho0, myk, mydm,
                            e1, ecoul, enuc, target)
    tloss = jax.block_until_ready(tloss)

    ref = _reference(output, myexc, g_weights, rho0, myk, mydm,
                     e1, ecoul, enuc, target)

    np.testing.assert_allclose(float(tloss), ref, rtol=1e-4, atol=1e-2)
    print("KERNEL_OK")
</pallas_src>

<mosaic_0001>
module attributes {stable_mosaic.version = 11 : i64} {
  func.func @_energy_kernel(%arg0: i32, %arg1: i32, %arg2: memref<8x512xf32, #tpu.memory_space<vmem>>, %arg3: memref<8x512xf32, #tpu.memory_space<vmem>>, %arg4: memref<8x512xf32, #tpu.memory_space<vmem>>, %arg5: memref<8x512xf32, #tpu.memory_space<vmem>>, %arg6: memref<8x128x128xf32, #tpu.memory_space<vmem>>, %arg7: memref<8x128x128xf32, #tpu.memory_space<vmem>>, %arg8: memref<8x128xf32, #tpu.memory_space<vmem>>, %arg9: memref<8x1xf32, #tpu.memory_space<vmem>>) attributes {dimension_semantics = [#tpu.dimension_semantics<parallel>, #tpu.dimension_semantics<arbitrary>], iteration_bounds = array<i64: 2, 2>, scalar_prefetch = 0 : i64, scratch_operands = 1 : i64, tpu.core_type = #tpu.core_type<tc>, window_params = [{transform_indices = @transform_0, window_bounds = array<i64: 8, 512>}, {transform_indices = @transform_1, window_bounds = array<i64: 8, 512>}, {transform_indices = @transform_2, window_bounds = array<i64: 8, 512>}, {transform_indices = @transform_3, window_bounds = array<i64: 8, 512>}, {transform_indices = @transform_4, window_bounds = array<i64: 8, 128, 128>}, {transform_indices = @transform_5, window_bounds = array<i64: 8, 128, 128>}, {transform_indices = @transform_6, window_bounds = array<i64: 8, 128>}]} {
    %c0_i32 = arith.constant 0 : i32
    %0 = arith.cmpi eq, %arg1, %c0_i32 : i32
    %1 = arith.extui %0 : i1 to i32
    %c0_i32_0 = arith.constant 0 : i32
    %2 = arith.cmpi ne, %1, %c0_i32_0 : i32
    scf.if %2 {
      %18 = tpu.iota {dimensions = array<i32: 0>} : vector<8x1xi32>
      %cst_13 = arith.constant 0.000000e+00 : f32
      %19 = vector.broadcast %cst_13 : f32 to vector<8x1xf32>
      %c0_14 = arith.constant 0 : index
      %c0_15 = arith.constant 0 : index
      %c0_16 = arith.constant 0 : index
      %20 = vector.load %arg6[%c0_14, %c0_15, %c0_16] : memref<8x128x128xf32, #tpu.memory_space<vmem>>, vector<1x128x128xf32>
      %21 = vector.shape_cast %20 : vector<1x128x128xf32> to vector<128x128xf32>
      %c0_17 = arith.constant 0 : index
      %c0_18 = arith.constant 0 : index
      %c0_19 = arith.constant 0 : index
      %22 = vector.load %arg7[%c0_17, %c0_18, %c0_19] : memref<8x128x128xf32, #tpu.memory_space<vmem>>, vector<1x128x128xf32>
      %23 = vector.shape_cast %22 : vector<1x128x128xf32> to vector<128x128xf32>
      %24 = tpu.transpose %23, [1, 0] : vector<128x128xf32> -> vector<128x128xf32>
      %25 = arith.mulf %21, %24 : vector<128x128xf32>
      %26 = vector.shape_cast %25 : vector<128x128xf32> to vector<1x128x128xf32>
      %cst_20 = arith.constant dense<0.000000e+00> : vector<1xf32>
      %27 = vector.multi_reduction <add>, %26, %cst_20 [1, 2] : vector<1x128x128xf32> to vector<1xf32>
      %28 = vector.shape_cast %27 : vector<1xf32> to vector<1x1x1xf32>
      %29 = vector.extract %28[0, 0, 0] : f32 from vector<1x1x1xf32>
      %c0_i32_21 = arith.constant 0 : i32
      %30 = vector.broadcast %c0_i32_21 : i32 to vector<8x1xi32>
      %31 = arith.cmpi eq, %18, %30 : vector<8x1xi32>
      %cst_22 = arith.constant 0.000000e+00 : f32
      %32 = vector.broadcast %29 : f32 to vector<8x1xf32>
      %33 = vector.broadcast %cst_22 : f32 to vector<8x1xf32>
      %34 = arith.select %31, %32, %33 : vector<8x1xi1>, vector<8x1xf32>
      %35 = arith.addf %19, %34 : vector<8x1xf32>
      %c1 = arith.constant 1 : index
      %c0_23 = arith.constant 0 : index
      %c0_24 = arith.constant 0 : index
      %36 = vector.load %arg6[%c1, %c0_23, %c0_24] : memref<8x128x128xf32, #tpu.memory_space<vmem>>, vector<1x128x128xf32>
      %37 = vector.shape_cast %36 : vector<1x128x128xf32> to vector<128x128xf32>
      %c1_25 = arith.constant 1 : index
      %c0_26 = arith.constant 0 : index
      %c0_27 = arith.constant 0 : index
      %38 = vector.load %arg7[%c1_25, %c0_26, %c0_27] : memref<8x128x128xf32, #tpu.memory_space<vmem>>, vector<1x128x128xf32>
      %39 = vector.shape_cast %38 : vector<1x128x128xf32> to vector<128x128xf32>
      %40 = tpu.transpose %39, [1, 0] : vector<128x128xf32> -> vector<128x128xf32>
      %41 = arith.mulf %37, %40 : vector<128x128xf32>
      %42 = vector.shape_cast %41 : vector<128x128xf32> to vector<1x128x128xf32>
      %cst_28 = arith.constant dense<0.000000e+00> : vector<1xf32>
      %43 = vector.multi_reduction <add>, %42, %cst_28 [1, 2] : vector<1x128x128xf32> to vector<1xf32>
      %44 = vector.shape_cast %43 : vector<1xf32> to vector<1x1x1xf32>
      %45 = vector.extract %44[0, 0, 0] : f32 from vector<1x1x1xf32>
      %c1_i32_29 = arith.constant 1 : i32
      %46 = vector.broadcast %c1_i32_29 : i32 to vector<8x1xi32>
      %47 = arith.cmpi eq, %18, %46 : vector<8x1xi32>
      %cst_30 = arith.constant 0.000000e+00 : f32
      %48 = vector.broadcast %45 : f32 to vector<8x1xf32>
      %49 = vector.broadcast %cst_30 : f32 to vector<8x1xf32>
      %50 = arith.select %47, %48, %49 : vector<8x1xi1>, vector<8x1xf32>
      %51 = arith.addf %35, %50 : vector<8x1xf32>
      %c2 = arith.constant 2 : index
      %c0_31 = arith.constant 0 : index
      %c0_32 = arith.constant 0 : index
      %52 = vector.load %arg6[%c2, %c0_31, %c0_32] : memref<8x128x128xf32, #tpu.memory_space<vmem>>, vector<1x128x128xf32>
      %53 = vector.shape_cast %52 : vector<1x128x128xf32> to vector<128x128xf32>
      %c2_33 = arith.constant 2 : index
      %c0_34 = arith.constant 0 : index
      %c0_35 = arith.constant 0 : index
      %54 = vector.load %arg7[%c2_33, %c0_34, %c0_35] : memref<8x128x128xf32, #tpu.memory_space<vmem>>, vector<1x128x128xf32>
      %55 = vector.shape_cast %54 : vector<1x128x128xf32> to vector<128x128xf32>
      %56 = tpu.transpose %55, [1, 0] : vector<128x128xf32> -> vector<128x128xf32>
      %57 = arith.mulf %53, %56 : vector<128x128xf32>
      %58 = vector.shape_cast %57 : vector<128x128xf32> to vector<1x128x128xf32>
      %cst_36 = arith.constant dense<0.000000e+00> : vector<1xf32>
      %59 = vector.multi_reduction <add>, %58, %cst_36 [1, 2] : vector<1x128x128xf32> to vector<1xf32>
      %60 = vector.shape_cast %59 : vector<1xf32> to vector<1x1x1xf32>
      %61 = vector.extract %60[0, 0, 0] : f32 from vector<1x1x1xf32>
      %c2_i32 = arith.constant 2 : i32
      %62 = vector.broadcast %c2_i32 : i32 to vector<8x1xi32>
      %63 = arith.cmpi eq, %18, %62 : vector<8x1xi32>
      %cst_37 = arith.constant 0.000000e+00 : f32
      %64 = vector.broadcast %61 : f32 to vector<8x1xf32>
      %65 = vector.broadcast %cst_37 : f32 to vector<8x1xf32>
      %66 = arith.select %63, %64, %65 : vector<8x1xi1>, vector<8x1xf32>
      %67 = arith.addf %51, %66 : vector<8x1xf32>
      %c3 = arith.constant 3 : index
      %c0_38 = arith.constant 0 : index
      %c0_39 = arith.constant 0 : index
      %68 = vector.load %arg6[%c3, %c0_38, %c0_39] : memref<8x128x128xf32, #tpu.memory_space<vmem>>, vector<1x128x128xf32>
      %69 = vector.shape_cast %68 : vector<1x128x128xf32> to vector<128x128xf32>
      %c3_40 = arith.constant 3 : index
      %c0_41 = arith.constant 0 : index
      %c0_42 = arith.constant 0 : index
      %70 = vector.load %arg7[%c3_40, %c0_41, %c0_42] : memref<8x128x128xf32, #tpu.memory_space<vmem>>, vector<1x128x128xf32>
      %71 = vector.shape_cast %70 : vector<1x128x128xf32> to vector<128x128xf32>
      %72 = tpu.transpose %71, [1, 0] : vector<128x128xf32> -> vector<128x128xf32>
      %73 = arith.mulf %69, %72 : vector<128x128xf32>
      %74 = vector.shape_cast %73 : vector<128x128xf32> to vector<1x128x128xf32>
      %cst_43 = arith.constant dense<0.000000e+00> : vector<1xf32>
      %75 = vector.multi_reduction <add>, %74, %cst_43 [1, 2] : vector<1x128x128xf32> to vector<1xf32>
      %76 = vector.shape_cast %75 : vector<1xf32> to vector<1x1x1xf32>
      %77 = vector.extract %76[0, 0, 0] : f32 from vector<1x1x1xf32>
      %c3_i32 = arith.constant 3 : i32
      %78 = vector.broadcast %c3_i32 : i32 to vector<8x1xi32>
      %79 = arith.cmpi eq, %18, %78 : vector<8x1xi32>
      %cst_44 = arith.constant 0.000000e+00 : f32
      %80 = vector.broadcast %77 : f32 to vector<8x1xf32>
      %81 = vector.broadcast %cst_44 : f32 to vector<8x1xf32>
      %82 = arith.select %79, %80, %81 : vector<8x1xi1>, vector<8x1xf32>
      %83 = arith.addf %67, %82 : vector<8x1xf32>
      %c4 = arith.constant 4 : index
      %c0_45 = arith.constant 0 : index
      %c0_46 = arith.constant 0 : index
      %84 = vector.load %arg6[%c4, %c0_45, %c0_46] : memref<8x128x128xf32, #tpu.memory_space<vmem>>, vector<1x128x128xf32>
      %85 = vector.shape_cast %84 : vector<1x128x128xf32> to vector<128x128xf32>
      %c4_47 = arith.constant 4 : index
      %c0_48 = arith.constant 0 : index
      %c0_49 = arith.constant 0 : index
      %86 = vector.load %arg7[%c4_47, %c0_48, %c0_49] : memref<8x128x128xf32, #tpu.memory_space<vmem>>, vector<1x128x128xf32>
      %87 = vector.shape_cast %86 : vector<1x128x128xf32> to vector<128x128xf32>
      %88 = tpu.transpose %87, [1, 0] : vector<128x128xf32> -> vector<128x128xf32>
      %89 = arith.mulf %85, %88 : vector<128x128xf32>
      %90 = vector.shape_cast %89 : vector<128x128xf32> to vector<1x128x128xf32>
      %cst_50 = arith.constant dense<0.000000e+00> : vector<1xf32>
      %91 = vector.multi_reduction <add>, %90, %cst_50 [1, 2] : vector<1x128x128xf32> to vector<1xf32>
      %92 = vector.shape_cast %91 : vector<1xf32> to vector<1x1x1xf32>
      %93 = vector.extract %92[0, 0, 0] : f32 from vector<1x1x1xf32>
      %c4_i32 = arith.constant 4 : i32
      %94 = vector.broadcast %c4_i32 : i32 to vector<8x1xi32>
      %95 = arith.cmpi eq, %18, %94 : vector<8x1xi32>
      %cst_51 = arith.constant 0.000000e+00 : f32
      %96 = vector.broadcast %93 : f32 to vector<8x1xf32>
      %97 = vector.broadcast %cst_51 : f32 to vector<8x1xf32>
      %98 = arith.select %95, %96, %97 : vector<8x1xi1>, vector<8x1xf32>
      %99 = arith.addf %83, %98 : vector<8x1xf32>
      %c5 = arith.constant 5 : index
      %c0_52 = arith.constant 0 : index
      %c0_53 = arith.constant 0 : index
      %100 = vector.load %arg6[%c5, %c0_52, %c0_53] : memref<8x128x128xf32, #tpu.memory_space<vmem>>, vector<1x128x128xf32>
      %101 = vector.shape_cast %100 : vector<1x128x128xf32> to vector<128x128xf32>
      %c5_54 = arith.constant 5 : index
      %c0_55 = arith.constant 0 : index
      %c0_56 = arith.constant 0 : index
      %102 = vector.load %arg7[%c5_54, %c0_55, %c0_56] : memref<8x128x128xf32, #tpu.memory_space<vmem>>, vector<1x128x128xf32>
      %103 = vector.shape_cast %102 : vector<1x128x128xf32> to vector<128x128xf32>
      %104 = tpu.transpose %103, [1, 0] : vector<128x128xf32> -> vector<128x128xf32>
      %105 = arith.mulf %101, %104 : vector<128x128xf32>
      %106 = vector.shape_cast %105 : vector<128x128xf32> to vector<1x128x128xf32>
      %cst_57 = arith.constant dense<0.000000e+00> : vector<1xf32>
      %107 = vector.multi_reduction <add>, %106, %cst_57 [1, 2] : vector<1x128x128xf32> to vector<1xf32>
      %108 = vector.shape_cast %107 : vector<1xf32> to vector<1x1x1xf32>
      %109 = vector.extract %108[0, 0, 0] : f32 from vector<1x1x1xf32>
      %c5_i32 = arith.constant 5 : i32
      %110 = vector.broadcast %c5_i32 : i32 to vector<8x1xi32>
      %111 = arith.cmpi eq, %18, %110 : vector<8x1xi32>
      %cst_58 = arith.constant 0.000000e+00 : f32
      %112 = vector.broadcast %109 : f32 to vector<8x1xf32>
      %113 = vector.broadcast %cst_58 : f32 to vector<8x1xf32>
      %114 = arith.select %111, %112, %113 : vector<8x1xi1>, vector<8x1xf32>
      %115 = arith.addf %99, %114 : vector<8x1xf32>
      %c6 = arith.constant 6 : index
      %c0_59 = arith.constant 0 : index
      %c0_60 = arith.constant 0 : index
      %116 = vector.load %arg6[%c6, %c0_59, %c0_60] : memref<8x128x128xf32, #tpu.memory_space<vmem>>, vector<1x128x128xf32>
      %117 = vector.shape_cast %116 : vector<1x128x128xf32> to vector<128x128xf32>
      %c6_61 = arith.constant 6 : index
      %c0_62 = arith.constant 0 : index
      %c0_63 = arith.constant 0 : index
      %118 = vector.load %arg7[%c6_61, %c0_62, %c0_63] : memref<8x128x128xf32, #tpu.memory_space<vmem>>, vector<1x128x128xf32>
      %119 = vector.shape_cast %118 : vector<1x128x128xf32> to vector<128x128xf32>
      %120 = tpu.transpose %119, [1, 0] : vector<128x128xf32> -> vector<128x128xf32>
      %121 = arith.mulf %117, %120 : vector<128x128xf32>
      %122 = vector.shape_cast %121 : vector<128x128xf32> to vector<1x128x128xf32>
      %cst_64 = arith.constant dense<0.000000e+00> : vector<1xf32>
      %123 = vector.multi_reduction <add>, %122, %cst_64 [1, 2] : vector<1x128x128xf32> to vector<1xf32>
      %124 = vector.shape_cast %123 : vector<1xf32> to vector<1x1x1xf32>
      %125 = vector.extract %124[0, 0, 0] : f32 from vector<1x1x1xf32>
      %c6_i32 = arith.constant 6 : i32
      %126 = vector.broadcast %c6_i32 : i32 to vector<8x1xi32>
      %127 = arith.cmpi eq, %18, %126 : vector<8x1xi32>
      %cst_65 = arith.constant 0.000000e+00 : f32
      %128 = vector.broadcast %125 : f32 to vector<8x1xf32>
      %129 = vector.broadcast %cst_65 : f32 to vector<8x1xf32>
      %130 = arith.select %127, %128, %129 : vector<8x1xi1>, vector<8x1xf32>
      %131 = arith.addf %115, %130 : vector<8x1xf32>
      %c7 = arith.constant 7 : index
      %c0_66 = arith.constant 0 : index
      %c0_67 = arith.constant 0 : index
      %132 = vector.load %arg6[%c7, %c0_66, %c0_67] : memref<8x128x128xf32, #tpu.memory_space<vmem>>, vector<1x128x128xf32>
      %133 = vector.shape_cast %132 : vector<1x128x128xf32> to vector<128x128xf32>
      %c7_68 = arith.constant 7 : index
      %c0_69 = arith.constant 0 : index
      %c0_70 = arith.constant 0 : index
      %134 = vector.load %arg7[%c7_68, %c0_69, %c0_70] : memref<8x128x128xf32, #tpu.memory_space<vmem>>, vector<1x128x128xf32>
      %135 = vector.shape_cast %134 : vector<1x128x128xf32> to vector<128x128xf32>
      %136 = tpu.transpose %135, [1, 0] : vector<128x128xf32> -> vector<128x128xf32>
      %137 = arith.mulf %133, %136 : vector<128x128xf32>
      %138 = vector.shape_cast %137 : vector<128x128xf32> to vector<1x128x128xf32>
      %cst_71 = arith.constant dense<0.000000e+00> : vector<1xf32>
      %139 = vector.multi_reduction <add>, %138, %cst_71 [1, 2] : vector<1x128x128xf32> to vector<1xf32>
      %140 = vector.shape_cast %139 : vector<1xf32> to vector<1x1x1xf32>
      %141 = vector.extract %140[0, 0, 0] : f32 from vector<1x1x1xf32>
      %c7_i32 = arith.constant 7 : i32
      %142 = vector.broadcast %c7_i32 : i32 to vector<8x1xi32>
      %143 = arith.cmpi eq, %18, %142 : vector<8x1xi32>
      %cst_72 = arith.constant 0.000000e+00 : f32
      %144 = vector.broadcast %141 : f32 to vector<8x1xf32>
      %145 = vector.broadcast %cst_72 : f32 to vector<8x1xf32>
      %146 = arith.select %143, %144, %145 : vector<8x1xi1>, vector<8x1xf32>
      %147 = arith.addf %131, %146 : vector<8x1xf32>
      %cst_73 = arith.constant -2.500000e-01 : f32
      %148 = vector.broadcast %cst_73 : f32 to vector<8x1xf32>
      %149 = arith.mulf %148, %147 : vector<8x1xf32>
      %c0_74 = arith.constant 0 : index
      %c0_75 = arith.constant 0 : index
      %150 = vector.load %arg9[%c0_74, %c0_75] : memref<8x1xf32, #tpu.memory_space<vmem>>, vector<8x1xf32>
      tpu.vector_store %arg9[%c0_74, %c0_75], %149 {strides = array<i32>} : memref<8x1xf32, #tpu.memory_space<vmem>>, vector<8x1xf32>,
    } else {
    }
    %c0 = arith.constant 0 : index
    %c0_1 = arith.constant 0 : index
    %3 = vector.load %arg2[%c0, %c0_1] : memref<8x512xf32, #tpu.memory_space<vmem>>, vector<8x512xf32>
    %c0_2 = arith.constant 0 : index
    %c0_3 = arith.constant 0 : index
    %4 = vector.load %arg3[%c0_2, %c0_3] : memref<8x512xf32, #tpu.memory_space<vmem>>, vector<8x512xf32>
    %5 = arith.addf %3, %4 : vector<8x512xf32>
    %c0_4 = arith.constant 0 : index
    %c0_5 = arith.constant 0 : index
    %6 = vector.load %arg4[%c0_4, %c0_5] : memref<8x512xf32, #tpu.memory_space<vmem>>, vector<8x512xf32>
    %7 = arith.mulf %5, %6 : vector<8x512xf32>
    %c0_6 = arith.constant 0 : index
    %c0_7 = arith.constant 0 : index
    %8 = vector.load %arg5[%c0_6, %c0_7] : memref<8x512xf32, #tpu.memory_space<vmem>>, vector<8x512xf32>
    %9 = arith.mulf %7, %8 : vector<8x512xf32>
    %cst = arith.constant dense<0.000000e+00> : vector<8xf32>
    %10 = vector.multi_reduction <add>, %9, %cst [1] : vector<8x512xf32> to vector<8xf32>
    %11 = vector.shape_cast %10 : vector<8xf32> to vector<8x1xf32>
    %c0_8 = arith.constant 0 : index
    %c0_9 = arith.constant 0 : index
    %12 = vector.load %arg9[%c0_8, %c0_9] : memref<8x1xf32, #tpu.memory_space<vmem>>, vector<8x1xf32>
    %13 = arith.addf %12, %11 : vector<8x1xf32>
    %c0_10 = arith.constant 0 : index
    %c0_11 = arith.constant 0 : index
    %14 = vector.load %arg9[%c0_10, %c0_11] : memref<8x1xf32, #tpu.memory_space<vmem>>, vector<8x1xf32>
    tpu.vector_store %arg9[%c0_10, %c0_11], %13 {strides = array<i32>} : memref<8x1xf32, #tpu.memory_space<vmem>>, vector<8x1xf32>,
    %c1_i32 = arith.constant 1 : i32
    %15 = arith.cmpi eq, %arg1, %c1_i32 : i32
    %16 = arith.extui %15 : i1 to i32
    %c0_i32_12 = arith.constant 0 : i32
    %17 = arith.cmpi ne, %16, %c0_i32_12 : i32
    scf.if %17 {
      %c0_13 = arith.constant 0 : index
      %c0_14 = arith.constant 0 : index
      %18 = vector.load %arg9[%c0_13, %c0_14] : memref<8x1xf32, #tpu.memory_space<vmem>>, vector<8x1xf32>
      %19 = vector.shape_cast %18 : vector<8x1xf32> to vector<8x1xf32>
      %20 = vector.broadcast %19 : vector<8x1xf32> to vector<8x128xf32>
      %c0_15 = arith.constant 0 : index
      %c0_16 = arith.constant 0 : index
      %21 = vector.load %arg8[%c0_15, %c0_16] : memref<8x128xf32, #tpu.memory_space<vmem>>, vector<8x128xf32>
      tpu.vector_store %arg8[%c0_15, %c0_16], %20 {strides = array<i32>} : memref<8x128xf32, #tpu.memory_space<vmem>>, vector<8x128xf32>,
    } else {
    }
    return
  }
  func.func @transform_0(%arg0: i32, %arg1: i32) -> (i32, i32) {
    %c0_i32 = arith.constant 0 : i32
    return %arg0, %arg1 : i32, i32
  }
  func.func @transform_1(%arg0: i32, %arg1: i32) -> (i32, i32) {
    %c0_i32 = arith.constant 0 : i32
    return %arg0, %arg1 : i32, i32
  }
  func.func @transform_2(%arg0: i32, %arg1: i32) -> (i32, i32) {
    %c0_i32 = arith.constant 0 : i32
    return %arg0, %arg1 : i32, i32
  }
  func.func @transform_3(%arg0: i32, %arg1: i32) -> (i32, i32) {
    %c0_i32 = arith.constant 0 : i32
    return %arg0, %arg1 : i32, i32
  }
  func.func @transform_4(%arg0: i32, %arg1: i32) -> (i32, i32, i32) {
    %c0_i32 = arith.constant 0 : i32
    %c0_i32_0 = arith.constant 0 : i32
    %c0_i32_1 = arith.constant 0 : i32
    return %arg0, %c0_i32, %c0_i32_0 : i32, i32, i32
  }
  func.func @transform_5(%arg0: i32, %arg1: i32) -> (i32, i32, i32) {
    %c0_i32 = arith.constant 0 : i32
    %c0_i32_0 = arith.constant 0 : i32
    %c0_i32_1 = arith.constant 0 : i32
    return %arg0, %c0_i32, %c0_i32_0 : i32, i32, i32
  }
  func.func @transform_6(%arg0: i32, %arg1: i32) -> (i32, i32) {
    %c0_i32 = arith.constant 0 : i32
    %c0_i32_0 = arith.constant 0 : i32
    return %arg0, %c0_i32 : i32, i32
  }
}

</mosaic_0001>

<llo_original>
// kernel: custom_mse_loss.1
$region0: #{custom_mse_loss.1}
  #allocation0 [shape = 'u32[]', space=smem, size = 0x4, offset = 0x4, fixed_abs, tag = 'smem constant byte address 0x4 - core index']
  #allocation1 [shape = 'u32[144,128]{1,0:T(1,128)}', space=vmem, size = 0x12000, scoped, tag = 'internal scratch']
  #allocation2 [shape = 'f32[8,1]{1,0:T(8,128)}', space=vmem, size = 0x1000, scoped, tag = 'scratch operand']
  %s0 = inlined_call_operand.hbm [shape: f32[16,1024], index: 0, kind: input, shape index: {}]
  %s1 = inlined_call_operand.hbm [shape: f32[16,1024], index: 1, kind: input, shape index: {}]
  %s2 = inlined_call_operand.hbm [shape: f32[16,1024], index: 2, kind: input, shape index: {}]
  %s3 = inlined_call_operand.hbm [shape: f32[16,1024], index: 3, kind: input, shape index: {}]
  %s4 = inlined_call_operand.hbm [shape: f32[16,128,128], index: 4, kind: input, shape index: {}]
  %s5 = inlined_call_operand.hbm [shape: f32[16,128,128], index: 5, kind: input, shape index: {}]
  %s6 = inlined_call_operand.vmem [shape: f32[16,128], index: 6, kind: output, shape index: {}]
  %s7 = sld [smem:[#allocation0]]
  $region89: #{custom_mse_loss.1} parent=0
    _
  %s9 = ssub.s32 1, %s7
  %s10 = scalar_select 0, %s9, %s7
  $region1: #{custom_mse_loss.1} parent=0
    #allocation3 [shape = 'u8[32768]{0}', space=vmem, size = 0x8000, scoped, tag = 'input window, operand 0']
    #allocation4 [shape = 's32[2]{0}', space=sflag, size = 0x8, scoped, tag = 'scoped memory for custom_mse_loss.1']
    #allocation5 [shape = 'u8[32768]{0}', space=vmem, size = 0x8000, scoped, tag = 'input window, operand 1']
    #allocation6 [shape = 's32[2]{0}', space=sflag, size = 0x8, scoped, tag = 'scoped memory for custom_mse_loss.1']
    #allocation7 [shape = 'u8[32768]{0}', space=vmem, size = 0x8000, scoped, tag = 'input window, operand 2']
    #allocation8 [shape = 'u8[32768]{0}', space=vmem, size = 0x8000, scoped, tag = 'input window, operand 3']
    #allocation9 [shape = 's32[2]{0}', space=sflag, size = 0x8, scoped, tag = 'scoped memory for custom_mse_loss.1']
    #allocation10 [shape = 'u8[1048576]{0}', space=vmem, size = 0x100000, scoped, tag = 'input window, operand 4']
    #allocation11 [shape = 'u8[1048576]{0}', space=vmem, size = 0x100000, scoped, tag = 'input window, operand 5']
    #allocation12 [shape = 's32[2]{0}', space=sflag, size = 0x8, scoped, tag = 'scoped memory for custom_mse_loss.1']
    %11 = vsyncpa [#allocation4], 0
    %s12 = scalar_lea.sflag [#allocation4], 1
    %13 = vsyncpa %s12, 0
    %14 = vsyncpa [#allocation6], 0
    %s15 = scalar_lea.sflag [#allocation6], 1
    %16 = vsyncpa %s15, 0
    %17 = vsyncpa [#allocation9], 0
    %s18 = scalar_lea.sflag [#allocation9], 1
    %19 = vsyncpa %s18, 0
    %20 = vsyncpa [#allocation12], 0
    %s21 = scalar_lea.sflag [#allocation12], 1
    %22 = vsyncpa %s21, 0
    loop: start=0, step=1, limit=6
    $region2: #{custom_mse_loss.1} parent=1 // loop_pre_header
      _
    $region3: #{custom_mse_loss.1} parent=1 // loop_header
      %s24 = sphi 0, %s28
      %p25 = scmp.ge.s32.totalorder %s24, 6
      %s31 = sphi 0, %s43
      %s32 = sphi 0, %s39
      %s33 = sphi 0, %s31
      %s34 = sphi 0, %s32
      %s35 = sphi 0, %s33
      %s36 = sphi 0, %s34
      %s48 = sphi 0, %s50
      %s51 = sphi 0, %s48
      %s52 = sphi 0, %s51
      %s68 = sphi 0, %s52
      %s76 = sphi 0, %s78
      %s79 = sphi 0, %s76
      %s80 = sphi 0, %s79
      %s96 = sphi 0, %s80
      %s104 = sphi 0, %s106
      %s107 = sphi 0, %s104
      %s108 = sphi 0, %s107
      %s124 = sphi 0, %s108
      %s132 = sphi 0, %s134
      %s135 = sphi 0, %s132
      %s136 = sphi 0, %s135
      %s152 = sphi 0, %s136
      %s158 = sphi 0, %s160
      %s161 = sphi 0, %s158
      %s162 = sphi 0, %s161
      %s178 = sphi 0, %s162
      %s184 = sphi 0, %s186
      %s187 = sphi 0, %s184
      %s188 = sphi 0, %s187
      %s204 = sphi 0, %s188
      %s210 = sphi 0, %s212
      %s213 = sphi 0, %s210
      %s214 = sphi 0, %s213
      %s230 = sphi 0, %s214
    $region4: #{custom_mse_loss.1} parent=1 // loop_header_branch
      %27 = sbr.rel (%p25) target = $region8
    $region5: #{custom_mse_loss.1} parent=1 // loop_body
      %s29 = ssub.s32 %s24, 1
      %s30 = ssub.s32 %s24, 2
      %s37 = sadd.s32 1, %s32
      %p38 = scmp.ge.s32.totalorder %s37, 2
      %s39 = scalar_select %p38, 0, %s37
      %s40 = sadd.s32 1, %s31
      %s41 = scalar_select %p38, %s40, %s31
      %p42 = scmp.ge.s32.totalorder %s41, 2
      %s43 = scalar_select %p42, 0, %s41
      %s44 = ssub.s32 %s31, %s43
      %s45 = ssub.s32 %s32, %s39
      %s46 = sor.u32 %s44, %s45
      %p47 = scmp.eq.s32.totalorder %s46, 0
      %s49 = sadd.s32 %s48, 1
      %s50 = scalar_select %p47, %s48, %s49
      %p53 = pneg %p47
      %p54 = scmp.eq.s32.totalorder %s24, 3
      %p55 = por %p53, %p54
      %p56 = scmp.ne.s32.totalorder %s48, %s51
      %p57 = scmp.eq.s32.totalorder %s24, 0
      %p58 = por %p56, %p57
      %p59 = scmp.ne.s32.totalorder %s48, %s51
      %p60 = scmp.eq.s32.totalorder %s29, 3
      %p61 = por %p59, %p60
      %p62 = scmp.ne.s32.totalorder %s51, %s52
      %p63 = scmp.eq.s32.totalorder %s29, 0
      %p64 = por %p62, %p63
      %p65 = scmp.ne.s32.totalorder %s51, %s52
      %p66 = scmp.eq.s32.totalorder %s30, 3
      %p67 = por %p65, %p66
      %p69 = scmp.ne.s32.totalorder %s52, %s68
      %p70 = scmp.eq.s32.totalorder %s30, 0
      %p71 = por %p69, %p70
      %s72 = ssub.s32 %s31, %s43
      %s73 = ssub.s32 %s32, %s39
      %s74 = sor.u32 %s72, %s73
      %p75 = scmp.eq.s32.totalorder %s74, 0
      %s77 = sadd.s32 %s76, 1
      %s78 = scalar_select %p75, %s76, %s77
      %p81 = pneg %p75
      %p82 = scmp.eq.s32.totalorder %s24, 3
      %p83 = por %p81, %p82
      %p84 = scmp.ne.s32.totalorder %s76, %s79
      %p85 = scmp.eq.s32.totalorder %s24, 0
      %p86 = por %p84, %p85
      %p87 = scmp.ne.s32.totalorder %s76, %s79
      %p88 = scmp.eq.s32.totalorder %s29, 3
      %p89 = por %p87, %p88
      %p90 = scmp.ne.s32.totalorder %s79, %s80
      %p91 = scmp.eq.s32.totalorder %s29, 0
      %p92 = por %p90, %p91
      %p93 = scmp.ne.s32.totalorder %s79, %s80
      %p94 = scmp.eq.s32.totalorder %s30, 3
      %p95 = por %p93, %p94
      %p97 = scmp.ne.s32.totalorder %s80, %s96
      %p98 = scmp.eq.s32.totalorder %s30, 0
      %p99 = por %p97, %p98
      %s100 = ssub.s32 %s31, %s43
      %s101 = ssub.s32 %s32, %s39
      %s102 = sor.u32 %s100, %s101
      %p103 = scmp.eq.s32.totalorder %s102, 0
      %s105 = sadd.s32 %s104, 1
      %s106 = scalar_select %p103, %s104, %s105
      %p109 = pneg %p103
      %p110 = scmp.eq.s32.totalorder %s24, 3
      %p111 = por %p109, %p110
      %p112 = scmp.ne.s32.totalorder %s104, %s107
      %p113 = scmp.eq.s32.totalorder %s24, 0
      %p114 = por %p112, %p113
      %p115 = scmp.ne.s32.totalorder %s104, %s107
      %p116 = scmp.eq.s32.totalorder %s29, 3
      %p117 = por %p115, %p116
      %p118 = scmp.ne.s32.totalorder %s107, %s108
      %p119 = scmp.eq.s32.totalorder %s29, 0
      %p120 = por %p118, %p119
      %p121 = scmp.ne.s32.totalorder %s107, %s108
      %p122 = scmp.eq.s32.totalorder %s30, 3
      %p123 = por %p121, %p122
      %p125 = scmp.ne.s32.totalorder %s108, %s124
      %p126 = scmp.eq.s32.totalorder %s30, 0
      %p127 = por %p125, %p126
      %s128 = ssub.s32 %s31, %s43
      %s129 = ssub.s32 %s32, %s39
      %s130 = sor.u32 %s128, %s129
      %p131 = scmp.eq.s32.totalorder %s130, 0
      %s133 = sadd.s32 %s132, 1
      %s134 = scalar_select %p131, %s132, %s133
      %p137 = pneg %p131
      %p138 = scmp.eq.s32.totalorder %s24, 3
      %p139 = por %p137, %p138
      %p140 = scmp.ne.s32.totalorder %s132, %s135
      %p141 = scmp.eq.s32.totalorder %s24, 0
      %p142 = por %p140, %p141
      %p143 = scmp.ne.s32.totalorder %s132, %s135
      %p144 = scmp.eq.s32.totalorder %s29, 3
      %p145 = por %p143, %p144
      %p146 = scmp.ne.s32.totalorder %s135, %s136
      %p147 = scmp.eq.s32.totalorder %s29, 0
      %p148 = por %p146, %p147
      %p149 = scmp.ne.s32.totalorder %s135, %s136
      %p150 = scmp.eq.s32.totalorder %s30, 3
      %p151 = por %p149, %p150
      %p153 = scmp.ne.s32.totalorder %s136, %s152
      %p154 = scmp.eq.s32.totalorder %s30, 0
      %p155 = por %p153, %p154
      %s156 = ssub.s32 %s31, %s43
      %p157 = scmp.eq.s32.totalorder %s156, 0
      %s159 = sadd.s32 %s158, 1
      %s160 = scalar_select %p157, %s158, %s159
      %p163 = pneg %p157
      %p164 = scmp.eq.s32.totalorder %s24, 3
      %p165 = por %p163, %p164
      %p166 = scmp.ne.s32.totalorder %s158, %s161
      %p167 = scmp.eq.s32.totalorder %s24, 0
      %p168 = por %p166, %p167
      %p169 = scmp.ne.s32.totalorder %s158, %s161
      %p170 = scmp.eq.s32.totalorder %s29, 3
      %p171 = por %p169, %p170
      %p172 = scmp.ne.s32.totalorder %s161, %s162
      %p173 = scmp.eq.s32.totalorder %s29, 0
      %p174 = por %p172, %p173
      %p175 = scmp.ne.s32.totalorder %s161, %s162
      %p176 = scmp.eq.s32.totalorder %s30, 3
      %p177 = por %p175, %p176
      %p179 = scmp.ne.s32.totalorder %s162, %s178
      %p180 = scmp.eq.s32.totalorder %s30, 0
      %p181 = por %p179, %p180
      %s182 = ssub.s32 %s31, %s43
      %p183 = scmp.eq.s32.totalorder %s182, 0
      %s185 = sadd.s32 %s184, 1
      %s186 = scalar_select %p183, %s184, %s185
      %p189 = pneg %p183
      %p190 = scmp.eq.s32.totalorder %s24, 3
      %p191 = por %p189, %p190
      %p192 = scmp.ne.s32.totalorder %s184, %s187
      %p193 = scmp.eq.s32.totalorder %s24, 0
      %p194 = por %p192, %p193
      %p195 = scmp.ne.s32.totalorder %s184, %s187
      %p196 = scmp.eq.s32.totalorder %s29, 3
      %p197 = por %p195, %p196
      %p198 = scmp.ne.s32.totalorder %s187, %s188
      %p199 = scmp.eq.s32.totalorder %s29, 0
      %p200 = por %p198, %p199
      %p201 = scmp.ne.s32.totalorder %s187, %s188
      %p202 = scmp.eq.s32.totalorder %s30, 3
      %p203 = por %p201, %p202
      %p205 = scmp.ne.s32.totalorder %s188, %s204
      %p206 = scmp.eq.s32.totalorder %s30, 0
      %p207 = por %p205, %p206
      %s208 = ssub.s32 %s31, %s43
      %p209 = scmp.eq.s32.totalorder %s208, 0
      %s211 = sadd.s32 %s210, 1
      %s212 = scalar_select %p209, %s210, %s211
      %p215 = pneg %p209
      %p216 = scmp.eq.s32.totalorder %s24, 3
      %p217 = por %p215, %p216
      %p218 = scmp.ne.s32.totalorder %s210, %s213
      %p219 = scmp.eq.s32.totalorder %s24, 0
      %p220 = por %p218, %p219
      %p221 = scmp.ne.s32.totalorder %s210, %s213
      %p222 = scmp.eq.s32.totalorder %s29, 3
      %p223 = por %p221, %p222
      %p224 = scmp.ne.s32.totalorder %s213, %s214
      %p225 = scmp.eq.s32.totalorder %s29, 0
      %p226 = por %p224, %p225
      %p227 = scmp.ne.s32.totalorder %s213, %s214
      %p228 = scmp.eq.s32.totalorder %s30, 3
      %p229 = por %p227, %p228
      %p231 = scmp.ne.s32.totalorder %s214, %s230
      %p232 = scmp.eq.s32.totalorder %s30, 0
      %p233 = por %p231, %p232
      %p234 = scmp.le.s32.totalorder 1, %s24
      %p235 = scmp.lt.s32.totalorder %s24, 5
      %p236 = pnand %p234, %p235
      %p237 = pneg %p236
      // Predicated region
      $region9: #{custom_mse_loss.1} parent=5 // pred_check
        _
      $region10: #{custom_mse_loss.1} parent=5 // pred_check_branch
        %239 = sbr.rel (%p236) target = $region12
      $region11: #{custom_mse_loss.1} parent=5 // pred_region
        %s240 = ssub.s32 %s24, 1
      $region12: #{custom_mse_loss.1} parent=5 // pred_fallthru
        _
      %p241 = scmp.lt.s32.totalorder %s24, 4
      // Predicated region
      $region13: #{custom_mse_loss.1} parent=5 // pred_check
        %p242 = pneg %p241
      $region14: #{custom_mse_loss.1} parent=5 // pred_check_branch
        %244 = sbr.rel (%p242) target = $region16
      $region15: #{custom_mse_loss.1} parent=5 // pred_region
        // Predicated region
        $region17: #{custom_mse_loss.1} parent=15 // pred_check
          %p245 = pneg %p58
        $region18: #{custom_mse_loss.1} parent=15 // pred_check_branch
          %247 = sbr.rel (%p245) target = $region20
        $region19: #{custom_mse_loss.1} parent=15 // pred_region
          %s248 = sand.u32 %s48, 1
          %s249 = scalar_lea.sflag [#allocation4], %s248
          %s250 = sand.u32 %s48, 1
          %s251 = smul.addr %s250, 32
          %s252 = scalar_lea.vmem [#allocation3], %s251
          %s253 = smul.u32 4, %s32
          %s255 = ssub.s32 512, 512
          %256 = vsyncadd %s249, %s255
          %s257 = smul.addr %s31, 8
          %s258 = sadd.s32 %s253, %s257
          %s259 = smul.addr %s258, 128
          %s260 = scalar_lea.hbm %s0, %s259
          %s262 = sshll.u32 %s252, 4
          %s263 = int_to_ptr.vmem [resolvable:$true] %s262
          %265 = dma.hbm_to_vmem [thread:$0]  %s260, 512, %s263, %s249
        $region20: #{custom_mse_loss.1} parent=15 // pred_fallthru
          _
        // Predicated region
        $region21: #{custom_mse_loss.1} parent=15 // pred_check
          %p266 = pneg %p86
        $region22: #{custom_mse_loss.1} parent=15 // pred_check_branch
          %268 = sbr.rel (%p266) target = $region24
        $region23: #{custom_mse_loss.1} parent=15 // pred_region
          %s269 = sand.u32 %s24, 1
          %s270 = scalar_lea.sflag [#allocation6], %s269
          %s271 = sand.u32 %s76, 1
          %s272 = smul.addr %s271, 32
          %s273 = scalar_lea.vmem [#allocation5], %s272
          %s274 = smul.u32 4, %s32
          %s276 = ssub.s32 512, 512
          %277 = vsyncadd %s270, %s276
          %s278 = smul.addr %s31, 8
          %s279 = sadd.s32 %s274, %s278
          %s280 = smul.addr %s279, 128
          %s281 = scalar_lea.hbm %s1, %s280
          %s283 = sshll.u32 %s273, 4
          %s284 = int_to_ptr.vmem [resolvable:$true] %s283
          %286 = dma.hbm_to_vmem [thread:$0]  %s281, 512, %s284, %s270
        $region24: #{custom_mse_loss.1} parent=15 // pred_fallthru
          _
        // Predicated region
        $region25: #{custom_mse_loss.1} parent=15 // pred_check
          %p287 = pneg %p114
        $region26: #{custom_mse_loss.1} parent=15 // pred_check_branch
          %289 = sbr.rel (%p287) target = $region28
        $region27: #{custom_mse_loss.1} parent=15 // pred_region
          %s290 = sand.u32 %s24, 1
          %s291 = scalar_lea.sflag [#allocation6], %s290
          %s292 = sand.u32 %s104, 1
          %s293 = smul.addr %s292, 32
          %s294 = scalar_lea.vmem [#allocation7], %s293
          %s295 = smul.u32 4, %s32
          %s297 = ssub.s32 512, 512
          %298 = vsyncadd %s291, %s297
          %s299 = smul.addr %s31, 8
          %s300 = sadd.s32 %s295, %s299
          %s301 = smul.addr %s300, 128
          %s302 = scalar_lea.hbm %s2, %s301
          %s304 = sshll.u32 %s294, 4
          %s305 = int_to_ptr.vmem [resolvable:$true] %s304
          %307 = dma.hbm_to_vmem [thread:$0]  %s302, 512, %s305, %s291
        $region28: #{custom_mse_loss.1} parent=15 // pred_fallthru
          _
        // Predicated region
        $region29: #{custom_mse_loss.1} parent=15 // pred_check
          %p308 = pneg %p142
        $region30: #{custom_mse_loss.1} parent=15 // pred_check_branch
          %310 = sbr.rel (%p308) target = $region32
        $region31: #{custom_mse_loss.1} parent=15 // pred_region
          %s311 = sand.u32 %s24, 1
          %s312 = scalar_lea.sflag [#allocation9], %s311
          %s313 = sand.u32 %s132, 1
          %s314 = smul.addr %s313, 32
          %s315 = scalar_lea.vmem [#allocation8], %s314
          %s316 = smul.u32 4, %s32
          %s318 = ssub.s32 512, 512
          %319 = vsyncadd %s312, %s318
          %s320 = smul.addr %s31, 8
          %s321 = sadd.s32 %s316, %s320
          %s322 = smul.addr %s321, 128
          %s323 = scalar_lea.hbm %s3, %s322
          %s325 = sshll.u32 %s315, 4
          %s326 = int_to_ptr.vmem [resolvable:$true] %s325
          %328 = dma.hbm_to_vmem [thread:$0]  %s323, 512, %s326, %s312
        $region32: #{custom_mse_loss.1} parent=15 // pred_fallthru
          _
        // Predicated region
        $region33: #{custom_mse_loss.1} parent=15 // pred_check
          %p329 = pneg %p168
        $region34: #{custom_mse_loss.1} parent=15 // pred_check_branch
          %331 = sbr.rel (%p329) target = $region36
        $region35: #{custom_mse_loss.1} parent=15 // pred_region
          %s332 = sand.u32 %s24, 1
          %s333 = scalar_lea.sflag [#allocation9], %s332
          %s334 = sand.u32 %s158, 1
          %s335 = smul.addr %s334, 1024
          %s336 = scalar_lea.vmem [#allocation10], %s335
          %s337 = smul.u32 8, %s31
          %s339 = ssub.s32 16384, 16384
          %340 = vsyncadd %s333, %s339
          %s341 = smul.addr %s337, 16
          %s342 = smul.addr %s341, 128
          %s343 = scalar_lea.hbm %s4, %s342
          %s344 = sshll.u32 %s336, 4
          %s345 = int_to_ptr.vmem [resolvable:$true] %s344
          %350 = dma.hbm_to_vmem [thread:$0]  %s343, 16384, %s345, %s333, 128, 128, 8
        $region36: #{custom_mse_loss.1} parent=15 // pred_fallthru
          _
        // Predicated region
        $region37: #{custom_mse_loss.1} parent=15 // pred_check
          %p351 = pneg %p194
        $region38: #{custom_mse_loss.1} parent=15 // pred_check_branch
          %353 = sbr.rel (%p351) target = $region40
        $region39: #{custom_mse_loss.1} parent=15 // pred_region
          %s354 = sand.u32 %s184, 1
          %s355 = scalar_lea.sflag [#allocation12], %s354
          %s356 = sand.u32 %s184, 1
          %s357 = smul.addr %s356, 1024
          %s358 = scalar_lea.vmem [#allocation11], %s357
          %s359 = smul.u32 8, %s31
          %s361 = ssub.s32 16384, 16384
          %362 = vsyncadd %s355, %s361
          %s363 = smul.addr %s359, 16
          %s364 = smul.addr %s363, 128
          %s365 = scalar_lea.hbm %s5, %s364
          %s366 = sshll.u32 %s358, 4
          %s367 = int_to_ptr.vmem [resolvable:$true] %s366
          %372 = dma.hbm_to_vmem [thread:$0]  %s365, 16384, %s367, %s355, 128, 128, 8
        $region40: #{custom_mse_loss.1} parent=15 // pred_fallthru
          _
      $region16: #{custom_mse_loss.1} parent=5 // pred_fallthru
        _
      %p373 = scmp.le.s32.totalorder 1, %s24
      %p374 = scmp.lt.s32.totalorder %s24, 5
      %p375 = pnand %p373, %p374
      %p376 = pneg %p375
      // Predicated region
      $region41: #{custom_mse_loss.1} parent=5 // pred_check
        _
      $region42: #{custom_mse_loss.1} parent=5 // pred_check_branch
        %378 = sbr.rel (%p375) target = $region44
      $region43: #{custom_mse_loss.1} parent=5 // pred_region
        %s379 = ssub.s32 %s24, 1
        %s380 = sand.u32 %s51, 1
        %s381 = scalar_lea.sflag [#allocation4], %s380
        %s382 = sand.u32 %s51, 1
        %s383 = smul.addr %s382, 32
        %s384 = scalar_lea.vmem [#allocation3], %s383
        // Predicated region
        $region45: #{custom_mse_loss.1} parent=43 // pred_check
          %p385 = pneg %p64
        $region46: #{custom_mse_loss.1} parent=43 // pred_check_branch
          %387 = sbr.rel (%p385) target = $region48
        $region47: #{custom_mse_loss.1} parent=43 // pred_region
          %388 = dma.done %s381, 512
        $region48: #{custom_mse_loss.1} parent=43 // pred_fallthru
          _
        %s389 = sand.u32 %s29, 1
        %s390 = scalar_lea.sflag [#allocation6], %s389
        %s391 = sand.u32 %s79, 1
        %s392 = smul.addr %s391, 32
        %s393 = scalar_lea.vmem [#allocation5], %s392
        // Predicated region
        $region49: #{custom_mse_loss.1} parent=43 // pred_check
          %p394 = pneg %p92
        $region50: #{custom_mse_loss.1} parent=43 // pred_check_branch
          %396 = sbr.rel (%p394) target = $region52
        $region51: #{custom_mse_loss.1} parent=43 // pred_region
          %397 = dma.done %s390, 512
        $region52: #{custom_mse_loss.1} parent=43 // pred_fallthru
          _
        %s398 = sand.u32 %s29, 1
        %s399 = scalar_lea.sflag [#allocation6], %s398
        %s400 = sand.u32 %s107, 1
        %s401 = smul.addr %s400, 32
        %s402 = scalar_lea.vmem [#allocation7], %s401
        // Predicated region
        $region53: #{custom_mse_loss.1} parent=43 // pred_check
          %p403 = pneg %p120
        $region54: #{custom_mse_loss.1} parent=43 // pred_check_branch
          %405 = sbr.rel (%p403) target = $region56
        $region55: #{custom_mse_loss.1} parent=43 // pred_region
          %406 = dma.done %s399, 512
        $region56: #{custom_mse_loss.1} parent=43 // pred_fallthru
          _
        %s407 = sand.u32 %s29, 1
        %s408 = scalar_lea.sflag [#allocation9], %s407
        %s409 = sand.u32 %s135, 1
        %s410 = smul.addr %s409, 32
        %s411 = scalar_lea.vmem [#allocation8], %s410
        // Predicated region
        $region57: #{custom_mse_loss.1} parent=43 // pred_check
          %p412 = pneg %p148
        $region58: #{custom_mse_loss.1} parent=43 // pred_check_branch
          %414 = sbr.rel (%p412) target = $region60
        $region59: #{custom_mse_loss.1} parent=43 // pred_region
          %415 = dma.done %s408, 512
        $region60: #{custom_mse_loss.1} parent=43 // pred_fallthru
          _
        %s416 = sand.u32 %s29, 1
        %s417 = scalar_lea.sflag [#allocation9], %s416
        %s418 = sand.u32 %s161, 1
        %s419 = smul.addr %s418, 1024
        %s420 = scalar_lea.vmem [#allocation10], %s419
        // Predicated region
        $region61: #{custom_mse_loss.1} parent=43 // pred_check
          %p421 = pneg %p174
        $region62: #{custom_mse_loss.1} parent=43 // pred_check_branch
          %423 = sbr.rel (%p421) target = $region64
        $region63: #{custom_mse_loss.1} parent=43 // pred_region
          %424 = dma.done %s417, 16384
        $region64: #{custom_mse_loss.1} parent=43 // pred_fallthru
          _
        %s425 = sand.u32 %s187, 1
        %s426 = scalar_lea.sflag [#allocation12], %s425
        %s427 = sand.u32 %s187, 1
        %s428 = smul.addr %s427, 1024
        %s429 = scalar_lea.vmem [#allocation11], %s428
        // Predicated region
        $region65: #{custom_mse_loss.1} parent=43 // pred_check
          %p430 = pneg %p200
        $region66: #{custom_mse_loss.1} parent=43 // pred_check_branch
          %432 = sbr.rel (%p430) target = $region68
        $region67: #{custom_mse_loss.1} parent=43 // pred_region
          %433 = dma.done %s426, 16384
        $region68: #{custom_mse_loss.1} parent=43 // pred_fallthru
          _
        %s434 = sand.u32 %s51, 1
        %s435 = scalar_lea.sflag [#allocation4], %s434
        %s436 = sand.u32 %s51, 1
        %s437 = smul.addr %s436, 32
        %s438 = scalar_lea.vmem [#allocation3], %s437
        %p439 = pneg %p64
        %p440 = pneg %p61
        %s441 = sand.u32 %s29, 1
        %s442 = scalar_lea.sflag [#allocation6], %s441
        %s443 = sand.u32 %s79, 1
        %s444 = smul.addr %s443, 32
        %s445 = scalar_lea.vmem [#allocation5], %s444
        %p446 = pneg %p92
        %p447 = pneg %p89
        %s448 = sand.u32 %s29, 1
        %s449 = scalar_lea.sflag [#allocation6], %s448
        %s450 = sand.u32 %s107, 1
        %s451 = smul.addr %s450, 32
        %s452 = scalar_lea.vmem [#allocation7], %s451
        %p453 = pneg %p120
        %p454 = pneg %p117
        %s455 = sand.u32 %s29, 1
        %s456 = scalar_lea.sflag [#allocation9], %s455
        %s457 = sand.u32 %s135, 1
        %s458 = smul.addr %s457, 32
        %s459 = scalar_lea.vmem [#allocation8], %s458
        %p460 = pneg %p148
        %p461 = pneg %p145
        %s462 = sand.u32 %s29, 1
        %s463 = scalar_lea.sflag [#allocation9], %s462
        %s464 = sand.u32 %s161, 1
        %s465 = smul.addr %s464, 1024
        %s466 = scalar_lea.vmem [#allocation10], %s465
        %p467 = pneg %p174
        %p468 = pneg %p171
        %s469 = sand.u32 %s187, 1
        %s470 = scalar_lea.sflag [#allocation12], %s469
        %s471 = sand.u32 %s187, 1
        %s472 = smul.addr %s471, 1024
        %s473 = scalar_lea.vmem [#allocation11], %s472
        %p474 = pneg %p200
        %p475 = pneg %p197
        %p476 = pneg %p226
        %p477 = pneg %p223
        %p478 = scmp.lt.s32.totalorder %s33, 1
        %s479 = scalar_select %p478, %s33, 1
        %s480 = smul.addr %s479, 8
        %s481 = scalar_lea.vmem %s6, %s480
        %s482 = smul.u32 4, %s34
        %s483 = smul.u32 4, %s34
        %s484 = smul.u32 4, %s34
        %s485 = smul.u32 4, %s34
        %s486 = smul.u32 8, %s33
        %s487 = smul.u32 8, %s33
        %p488 = scmp.lt.s32.totalorder %s33, 1
        %s489 = scalar_select %p488, %s33, 1
        %s490 = smul.addr %s489, 8
        %s491 = scalar_lea.vmem %s6, %s490
        %p492 = scmp.eq.s32.totalorder %s34, 0
        // Predicated region
        $region69: #{custom_mse_loss.1} parent=43 // pred_check
          %p493 = pneg %p492
        $region70: #{custom_mse_loss.1} parent=43 // pred_check_branch
          %495 = sbr.rel (%p493) target = $region72
        $region71: #{custom_mse_loss.1} parent=43 // pred_region
          %v496 = vlaneseq
          %v497 = vshrl.u32 %v496, 7
          %v498 = vld [vmem:[%s420] sm:$0xff]
          %v499 = vld [vmem:[%s420 + $0x8] sm:$0xff]
          %v500 = vld [vmem:[%s420 + $0x10] sm:$0xff]
          %v501 = vld [vmem:[%s420 + $0x18] sm:$0xff]
          %v502 = vld [vmem:[%s420 + $0x20] sm:$0xff]
          %v503 = vld [vmem:[%s420 + $0x28] sm:$0xff]
          %v504 = vld [vmem:[%s420 + $0x30] sm:$0xff]
          %v505 = vld [vmem:[%s420 + $0x38] sm:$0xff]
          %v506 = vld [vmem:[%s420 + $0x40] sm:$0xff]
          %v507 = vld [vmem:[%s420 + $0x48] sm:$0xff]
          %v508 = vld [vmem:[%s420 + $0x50] sm:$0xff]
          %v509 = vld [vmem:[%s420 + $0x58] sm:$0xff]
          %v510 = vld [vmem:[%s420 + $0x60] sm:$0xff]
          %v511 = vld [vmem:[%s420 + $0x68] sm:$0xff]
          %v512 = vld [vmem:[%s420 + $0x70] sm:$0xff]
          %v513 = vld [vmem:[%s420 + $0x78] sm:$0xff]
          %v514 = vld [vmem:[%s429] sm:$0xff]
          %v515 = vld [vmem:[%s429 + $0x8] sm:$0xff]
          %v516 = vld [vmem:[%s429 + $0x10] sm:$0xff]
          %v517 = vld [vmem:[%s429 + $0x18] sm:$0xff]
          %v518 = vld [vmem:[%s429 + $0x20] sm:$0xff]
          %v519 = vld [vmem:[%s429 + $0x28] sm:$0xff]
          %v520 = vld [vmem:[%s429 + $0x30] sm:$0xff]
          %v521 = vld [vmem:[%s429 + $0x38] sm:$0xff]
          %v522 = vld [vmem:[%s429 + $0x40] sm:$0xff]
          %v523 = vld [vmem:[%s429 + $0x48] sm:$0xff]
          %v524 = vld [vmem:[%s429 + $0x50] sm:$0xff]
          %v525 = vld [vmem:[%s429 + $0x58] sm:$0xff]
          %v526 = vld [vmem:[%s429 + $0x60] sm:$0xff]
          %v527 = vld [vmem:[%s429 + $0x68] sm:$0xff]
          %v528 = vld [vmem:[%s429 + $0x70] sm:$0xff]
          %v529 = vld [vmem:[%s429 + $0x78] sm:$0xff]
          %530 = vxpose.xlu0.b32.start [1/16] %v514, 128
          %531 = vxpose.xlu0.b32.cont [2/16] %v515, 128
          %532 = vxpose.xlu0.b32.cont [3/16] %v516, 128
          %533 = vxpose.xlu0.b32.cont [4/16] %v517, 128
          %534 = vxpose.xlu0.b32.cont [5/16] %v518, 128
          %535 = vxpose.xlu0.b32.cont [6/16] %v519, 128
          %536 = vxpose.xlu0.b32.cont [7/16] %v520, 128
          %537 = vxpose.xlu0.b32.cont [8/16] %v521, 128
          %538 = vxpose.xlu0.b32.cont [9/16] %v522, 128
          %539 = vxpose.xlu0.b32.cont [10/16] %v523, 128
          %540 = vxpose.xlu0.b32.cont [11/16] %v524, 128
          %541 = vxpose.xlu0.b32.cont [12/16] %v525, 128
          %542 = vxpose.xlu0.b32.cont [13/16] %v526, 128
          %543 = vxpose.xlu0.b32.cont [14/16] %v527, 128
          %544 = vxpose.xlu0.b32.cont [15/16] %v528, 128
          %545 = vxpose.xlu0.b32.end [16/16] %v529, 128
          %v546 = vpop.trf.xlu0
          %v547 = vpop.trf.xlu0
          %v548 = vpop.trf.xlu0
          %v549 = vpop.trf.xlu0
          %v550 = vpop.trf.xlu0
          %v551 = vpop.trf.xlu0
          %v552 = vpop.trf.xlu0
          %v553 = vpop.trf.xlu0
          %v554 = vpop.trf.xlu0
          %v555 = vpop.trf.xlu0
          %v556 = vpop.trf.xlu0
          %v557 = vpop.trf.xlu0
          %v558 = vpop.trf.xlu0
          %v559 = vpop.trf.xlu0
          %v560 = vpop.trf.xlu0
          %v561 = vpop.trf.xlu0
          %v562 = vmul.f32 %v498, %v546
          %v563 = vmul.f32 %v499, %v547
          %v564 = vmul.f32 %v500, %v548
          %v565 = vmul.f32 %v501, %v549
          %v566 = vmul.f32 %v502, %v550
          %v567 = vmul.f32 %v503, %v551
          %v568 = vmul.f32 %v504, %v552
          %v569 = vmul.f32 %v505, %v553
          %v570 = vmul.f32 %v506, %v554
          %v571 = vmul.f32 %v507, %v555
          %v572 = vmul.f32 %v508, %v556
          %v573 = vmul.f32 %v509, %v557
          %v574 = vmul.f32 %v510, %v558
          %v575 = vmul.f32 %v511, %v559
          %v576 = vmul.f32 %v512, %v560
          %v577 = vmul.f32 %v513, %v561
          %v578 = vadd.f32 %v562, %v563
          %v579 = vadd.f32 %v578, %v564
          %v580 = vadd.f32 %v579, %v565
          %v581 = vadd.f32 %v580, %v566
          %v582 = vadd.f32 %v581, %v567
          %v583 = vadd.f32 %v582, %v568
          %v584 = vadd.f32 %v583, %v569
          %v585 = vadd.f32 %v584, %v570
          %v586 = vadd.f32 %v585, %v571
          %v587 = vadd.f32 %v586, %v572
          %v588 = vadd.f32 %v587, %v573
          %v589 = vadd.f32 %v588, %v574
          %v590 = vadd.f32 %v589, %v575
          %v591 = vadd.f32 %v590, %v576
          %v592 = vadd.f32 %v591, %v577
          %593 = vadd.xlane.f32.xlu0 %v592
          %v594 = vpop.xlane.xlu0 %593
          %v595 = vrot.slane %v594, 4
          %v596 = vadd.f32 %v594, %v595
          %v597 = vrot.slane %v596, 2
          %v598 = vadd.f32 %v596, %v597
          %v599 = vrot.slane %v598, 1
          %v600 = vadd.f32 %v598, %v599
          %s601 = vtos %v600
          %vm602 = vcmp.eq.s32.totalorder %v497, 0
          %v603 = vstv %s601
          %v604 = vsel %vm602, %v603, 0.0
          %v605 = vadd.f32 %v604, 0.0
          %s606 = scalar_lea.vmem %s420, 128 [#allocation10]
          %v607 = vld [vmem:[%s606] sm:$0xff]
          %v608 = vld [vmem:[%s606 + $0x8] sm:$0xff]
          %v609 = vld [vmem:[%s606 + $0x10] sm:$0xff]
          %v610 = vld [vmem:[%s606 + $0x18] sm:$0xff]
          %v611 = vld [vmem:[%s606 + $0x20] sm:$0xff]
          %v612 = vld [vmem:[%s606 + $0x28] sm:$0xff]
          %v613 = vld [vmem:[%s606 + $0x30] sm:$0xff]
          %v614 = vld [vmem:[%s606 + $0x38] sm:$0xff]
          %v615 = vld [vmem:[%s606 + $0x40] sm:$0xff]
          %v616 = vld [vmem:[%s606 + $0x48] sm:$0xff]
          %v617 = vld [vmem:[%s606 + $0x50] sm:$0xff]
          %v618 = vld [vmem:[%s606 + $0x58] sm:$0xff]
          %v619 = vld [vmem:[%s606 + $0x60] sm:$0xff]
          %v620 = vld [vmem:[%s606 + $0x68] sm:$0xff]
          %v621 = vld [vmem:[%s606 + $0x70] sm:$0xff]
          %v622 = vld [vmem:[%s606 + $0x78] sm:$0xff]
          %s623 = scalar_lea.vmem %s429, 128 [#allocation11]
          %v624 = vld [vmem:[%s623] sm:$0xff]
          %v625 = vld [vmem:[%s623 + $0x8] sm:$0xff]
          %v626 = vld [vmem:[%s623 + $0x10] sm:$0xff]
          %v627 = vld [vmem:[%s623 + $0x18] sm:$0xff]
          %v628 = vld [vmem:[%s623 + $0x20] sm:$0xff]
          %v629 = vld [vmem:[%s623 + $0x28] sm:$0xff]
          %v630 = vld [vmem:[%s623 + $0x30] sm:$0xff]
          %v631 = vld [vmem:[%s623 + $0x38] sm:$0xff]
          %v632 = vld [vmem:[%s623 + $0x40] sm:$0xff]
          %v633 = vld [vmem:[%s623 + $0x48] sm:$0xff]
          %v634 = vld [vmem:[%s623 + $0x50] sm:$0xff]
          %v635 = vld [vmem:[%s623 + $0x58] sm:$0xff]
          %v636 = vld [vmem:[%s623 + $0x60] sm:$0xff]
          %v637 = vld [vmem:[%s623 + $0x68] sm:$0xff]
          %v638 = vld [vmem:[%s623 + $0x70] sm:$0xff]
          %v639 = vld [vmem:[%s623 + $0x78] sm:$0xff]
          %640 = vxpose.xlu0.b32.start [1/16] %v624, 128
          %641 = vxpose.xlu0.b32.cont [2/16] %v625, 128
          %642 = vxpose.xlu0.b32.cont [3/16] %v626, 128
          %643 = vxpose.xlu0.b32.cont [4/16] %v627, 128
          %644 = vxpose.xlu0.b32.cont [5/16] %v628, 128
          %645 = vxpose.xlu0.b32.cont [6/16] %v629, 128
          %646 = vxpose.xlu0.b32.cont [7/16] %v630, 128
          %647 = vxpose.xlu0.b32.cont [8/16] %v631, 128
          %648 = vxpose.xlu0.b32.cont [9/16] %v632, 128
          %649 = vxpose.xlu0.b32.cont [10/16] %v633, 128
          %650 = vxpose.xlu0.b32.cont [11/16] %v634, 128
          %651 = vxpose.xlu0.b32.cont [12/16] %v635, 128
          %652 = vxpose.xlu0.b32.cont [13/16] %v636, 128
          %653 = vxpose.xlu0.b32.cont [14/16] %v637, 128
          %654 = vxpose.xlu0.b32.cont [15/16] %v638, 128
          %655 = vxpose.xlu0.b32.end [16/16] %v639, 128
          %v656 = vpop.trf.xlu0
          %v657 = vpop.trf.xlu0
          %v658 = vpop.trf.xlu0
          %v659 = vpop.trf.xlu0
          %v660 = vpop.trf.xlu0
          %v661 = vpop.trf.xlu0
          %v662 = vpop.trf.xlu0
          %v663 = vpop.trf.xlu0
          %v664 = vpop.trf.xlu0
          %v665 = vpop.trf.xlu0
          %v666 = vpop.trf.xlu0
          %v667 = vpop.trf.xlu0
          %v668 = vpop.trf.xlu0
          %v669 = vpop.trf.xlu0
          %v670 = vpop.trf.xlu0
          %v671 = vpop.trf.xlu0
          %v672 = vmul.f32 %v607, %v656
          %v673 = vmul.f32 %v608, %v657
          %v674 = vmul.f32 %v609, %v658
          %v675 = vmul.f32 %v610, %v659
          %v676 = vmul.f32 %v611, %v660
          %v677 = vmul.f32 %v612, %v661
          %v678 = vmul.f32 %v613, %v662
          %v679 = vmul.f32 %v614, %v663
          %v680 = vmul.f32 %v615, %v664
          %v681 = vmul.f32 %v616, %v665
          %v682 = vmul.f32 %v617, %v666
          %v683 = vmul.f32 %v618, %v667
          %v684 = vmul.f32 %v619, %v668
          %v685 = vmul.f32 %v620, %v669
          %v686 = vmul.f32 %v621, %v670
          %v687 = vmul.f32 %v622, %v671
          %v688 = vadd.f32 %v672, %v673
          %v689 = vadd.f32 %v688, %v674
          %v690 = vadd.f32 %v689, %v675
          %v691 = vadd.f32 %v690, %v676
          %v692 = vadd.f32 %v691, %v677
          %v693 = vadd.f32 %v692, %v678
          %v694 = vadd.f32 %v693, %v679
          %v695 = vadd.f32 %v694, %v680
          %v696 = vadd.f32 %v695, %v681
          %v697 = vadd.f32 %v696, %v682
          %v698 = vadd.f32 %v697, %v683
          %v699 = vadd.f32 %v698, %v684
          %v700 = vadd.f32 %v699, %v685
          %v701 = vadd.f32 %v700, %v686
          %v702 = vadd.f32 %v701, %v687
          %703 = vadd.xlane.f32.xlu0 %v702
          %v704 = vpop.xlane.xlu0 %703
          %v705 = vrot.slane %v704, 4
          %v706 = vadd.f32 %v704, %v705
          %v707 = vrot.slane %v706, 2
          %v708 = vadd.f32 %v706, %v707
          %v709 = vrot.slane %v708, 1
          %v710 = vadd.f32 %v708, %v709
          %s711 = vtos %v710
          %vm712 = vcmp.eq.s32.totalorder %v497, 1
          %v713 = vstv %s711
          %v714 = vsel %vm712, %v713, 0.0
          %v715 = vadd.f32 %v605, %v714
          %s716 = scalar_lea.vmem %s420, 256 [#allocation10]
          %v717 = vld [vmem:[%s716] sm:$0xff]
          %v718 = vld [vmem:[%s716 + $0x8] sm:$0xff]
          %v719 = vld [vmem:[%s716 + $0x10] sm:$0xff]
          %v720 = vld [vmem:[%s716 + $0x18] sm:$0xff]
          %v721 = vld [vmem:[%s716 + $0x20] sm:$0xff]
          %v722 = vld [vmem:[%s716 + $0x28] sm:$0xff]
          %v723 = vld [vmem:[%s716 + $0x30] sm:$0xff]
          %v724 = vld [vmem:[%s716 + $0x38] sm:$0xff]
          %v725 = vld [vmem:[%s716 + $0x40] sm:$0xff]
          %v726 = vld [vmem:[%s716 + $0x48] sm:$0xff]
          %v727 = vld [vmem:[%s716 + $0x50] sm:$0xff]
          %v728 = vld [vmem:[%s716 + $0x58] sm:$0xff]
          %v729 = vld [vmem:[%s716 + $0x60] sm:$0xff]
          %v730 = vld [vmem:[%s716 + $0x68] sm:$0xff]
          %v731 = vld [vmem:[%s716 + $0x70] sm:$0xff]
          %v732 = vld [vmem:[%s716 + $0x78] sm:$0xff]
          %s733 = scalar_lea.vmem %s429, 256 [#allocation11]
          %v734 = vld [vmem:[%s733] sm:$0xff]
          %v735 = vld [vmem:[%s733 + $0x8] sm:$0xff]
          %v736 = vld [vmem:[%s733 + $0x10] sm:$0xff]
          %v737 = vld [vmem:[%s733 + $0x18] sm:$0xff]
          %v738 = vld [vmem:[%s733 + $0x20] sm:$0xff]
          %v739 = vld [vmem:[%s733 + $0x28] sm:$0xff]
          %v740 = vld [vmem:[%s733 + $0x30] sm:$0xff]
          %v741 = vld [vmem:[%s733 + $0x38] sm:$0xff]
          %v742 = vld [vmem:[%s733 + $0x40] sm:$0xff]
          %v743 = vld [vmem:[%s733 + $0x48] sm:$0xff]
          %v744 = vld [vmem:[%s733 + $0x50] sm:$0xff]
          %v745 = vld [vmem:[%s733 + $0x58] sm:$0xff]
          %v746 = vld [vmem:[%s733 + $0x60] sm:$0xff]
          %v747 = vld [vmem:[%s733 + $0x68] sm:$0xff]
          %v748 = vld [vmem:[%s733 + $0x70] sm:$0xff]
          %v749 = vld [vmem:[%s733 + $0x78] sm:$0xff]
          %750 = vxpose.xlu0.b32.start [1/16] %v734, 128
          %751 = vxpose.xlu0.b32.cont [2/16] %v735, 128
          %752 = vxpose.xlu0.b32.cont [3/16] %v736, 128
          %753 = vxpose.xlu0.b32.cont [4/16] %v737, 128
          %754 = vxpose.xlu0.b32.cont [5/16] %v738, 128
          %755 = vxpose.xlu0.b32.cont [6/16] %v739, 128
          %756 = vxpose.xlu0.b32.cont [7/16] %v740, 128
          %757 = vxpose.xlu0.b32.cont [8/16] %v741, 128
          %758 = vxpose.xlu0.b32.cont [9/16] %v742, 128
          %759 = vxpose.xlu0.b32.cont [10/16] %v743, 128
          %760 = vxpose.xlu0.b32.cont [11/16] %v744, 128
          %761 = vxpose.xlu0.b32.cont [12/16] %v745, 128
          %762 = vxpose.xlu0.b32.cont [13/16] %v746, 128
          %763 = vxpose.xlu0.b32.cont [14/16] %v747, 128
          %764 = vxpose.xlu0.b32.cont [15/16] %v748, 128
          %765 = vxpose.xlu0.b32.end [16/16] %v749, 128
          %v766 = vpop.trf.xlu0
          %v767 = vpop.trf.xlu0
          %v768 = vpop.trf.xlu0
          %v769 = vpop.trf.xlu0
          %v770 = vpop.trf.xlu0
          %v771 = vpop.trf.xlu0
          %v772 = vpop.trf.xlu0
          %v773 = vpop.trf.xlu0
          %v774 = vpop.trf.xlu0
          %v775 = vpop.trf.xlu0
          %v776 = vpop.trf.xlu0
          %v777 = vpop.trf.xlu0
          %v778 = vpop.trf.xlu0
          %v779 = vpop.trf.xlu0
          %v780 = vpop.trf.xlu0
          %v781 = vpop.trf.xlu0
          %v782 = vmul.f32 %v717, %v766
          %v783 = vmul.f32 %v718, %v767
          %v784 = vmul.f32 %v719, %v768
          %v785 = vmul.f32 %v720, %v769
          %v786 = vmul.f32 %v721, %v770
          %v787 = vmul.f32 %v722, %v771
          %v788 = vmul.f32 %v723, %v772
          %v789 = vmul.f32 %v724, %v773
          %v790 = vmul.f32 %v725, %v774
          %v791 = vmul.f32 %v726, %v775
          %v792 = vmul.f32 %v727, %v776
          %v793 = vmul.f32 %v728, %v777
          %v794 = vmul.f32 %v729, %v778
          %v795 = vmul.f32 %v730, %v779
          %v796 = vmul.f32 %v731, %v780
          %v797 = vmul.f32 %v732, %v781
          %v798 = vadd.f32 %v782, %v783
          %v799 = vadd.f32 %v798, %v784
          %v800 = vadd.f32 %v799, %v785
          %v801 = vadd.f32 %v800, %v786
          %v802 = vadd.f32 %v801, %v787
          %v803 = vadd.f32 %v802, %v788
          %v804 = vadd.f32 %v803, %v789
          %v805 = vadd.f32 %v804, %v790
          %v806 = vadd.f32 %v805, %v791
          %v807 = vadd.f32 %v806, %v792
          %v808 = vadd.f32 %v807, %v793
          %v809 = vadd.f32 %v808, %v794
          %v810 = vadd.f32 %v809, %v795
          %v811 = vadd.f32 %v810, %v796
          %v812 = vadd.f32 %v811, %v797
          %813 = vadd.xlane.f32.xlu0 %v812
          %v814 = vpop.xlane.xlu0 %813
          %v815 = vrot.slane %v814, 4
          %v816 = vadd.f32 %v814, %v815
          %v817 = vrot.slane %v816, 2
          %v818 = vadd.f32 %v816, %v817
          %v819 = vrot.slane %v818, 1
          %v820 = vadd.f32 %v818, %v819
          %s821 = vtos %v820
          %vm822 = vcmp.eq.s32.totalorder %v497, 2
          %v823 = vstv %s821
          %v824 = vsel %vm822, %v823, 0.0
          %v825 = vadd.f32 %v715, %v824
          %s826 = scalar_lea.vmem %s420, 384 [#allocation10]
          %v827 = vld [vmem:[%s826] sm:$0xff]
          %v828 = vld [vmem:[%s826 + $0x8] sm:$0xff]
          %v829 = vld [vmem:[%s826 + $0x10] sm:$0xff]
          %v830 = vld [vmem:[%s826 + $0x18] sm:$0xff]
          %v831 = vld [vmem:[%s826 + $0x20] sm:$0xff]
          %v832 = vld [vmem:[%s826 + $0x28] sm:$0xff]
          %v833 = vld [vmem:[%s826 + $0x30] sm:$0xff]
          %v834 = vld [vmem:[%s826 + $0x38] sm:$0xff]
          %v835 = vld [vmem:[%s826 + $0x40] sm:$0xff]
          %v836 = vld [vmem:[%s826 + $0x48] sm:$0xff]
          %v837 = vld [vmem:[%s826 + $0x50] sm:$0xff]
          %v838 = vld [vmem:[%s826 + $0x58] sm:$0xff]
          %v839 = vld [vmem:[%s826 + $0x60] sm:$0xff]
          %v840 = vld [vmem:[%s826 + $0x68] sm:$0xff]
          %v841 = vld [vmem:[%s826 + $0x70] sm:$0xff]
          %v842 = vld [vmem:[%s826 + $0x78] sm:$0xff]
          %s843 = scalar_lea.vmem %s429, 384 [#allocation11]
          %v844 = vld [vmem:[%s843] sm:$0xff]
          %v845 = vld [vmem:[%s843 + $0x8] sm:$0xff]
          %v846 = vld [vmem:[%s843 + $0x10] sm:$0xff]
          %v847 = vld [vmem:[%s843 + $0x18] sm:$0xff]
          %v848 = vld [vmem:[%s843 + $0x20] sm:$0xff]
          %v849 = vld [vmem:[%s843 + $0x28] sm:$0xff]
          %v850 = vld [vmem:[%s843 + $0x30] sm:$0xff]
          %v851 = vld [vmem:[%s843 + $0x38] sm:$0xff]
          %v852 = vld [vmem:[%s843 + $0x40] sm:$0xff]
          %v853 = vld [vmem:[%s843 + $0x48] sm:$0xff]
          %v854 = vld [vmem:[%s843 + $0x50] sm:$0xff]
          %v855 = vld [vmem:[%s843 + $0x58] sm:$0xff]
          %v856 = vld [vmem:[%s843 + $0x60] sm:$0xff]
          %v857 = vld [vmem:[%s843 + $0x68] sm:$0xff]
          %v858 = vld [vmem:[%s843 + $0x70] sm:$0xff]
          %v859 = vld [vmem:[%s843 + $0x78] sm:$0xff]
          %860 = vxpose.xlu0.b32.start [1/16] %v844, 128
          %861 = vxpose.xlu0.b32.cont [2/16] %v845, 128
          %862 = vxpose.xlu0.b32.cont [3/16] %v846, 128
          %863 = vxpose.xlu0.b32.cont [4/16] %v847, 128
          %864 = vxpose.xlu0.b32.cont [5/16] %v848, 128
          %865 = vxpose.xlu0.b32.cont [6/16] %v849, 128
          %866 = vxpose.xlu0.b32.cont [7/16] %v850, 128
          %867 = vxpose.xlu0.b32.cont [8/16] %v851, 128
          %868 = vxpose.xlu0.b32.cont [9/16] %v852, 128
          %869 = vxpose.xlu0.b32.cont [10/16] %v853, 128
          %870 = vxpose.xlu0.b32.cont [11/16] %v854, 128
          %871 = vxpose.xlu0.b32.cont [12/16] %v855, 128
          %872 = vxpose.xlu0.b32.cont [13/16] %v856, 128
          %873 = vxpose.xlu0.b32.cont [14/16] %v857, 128
          %874 = vxpose.xlu0.b32.cont [15/16] %v858, 128
          %875 = vxpose.xlu0.b32.end [16/16] %v859, 128
          %v876 = vpop.trf.xlu0
          %v877 = vpop.trf.xlu0
          %v878 = vpop.trf.xlu0
          %v879 = vpop.trf.xlu0
          %v880 = vpop.trf.xlu0
          %v881 = vpop.trf.xlu0
          %v882 = vpop.trf.xlu0
          %v883 = vpop.trf.xlu0
          %v884 = vpop.trf.xlu0
          %v885 = vpop.trf.xlu0
          %v886 = vpop.trf.xlu0
          %v887 = vpop.trf.xlu0
          %v888 = vpop.trf.xlu0
          %v889 = vpop.trf.xlu0
          %v890 = vpop.trf.xlu0
          %v891 = vpop.trf.xlu0
          %v892 = vmul.f32 %v827, %v876
          %v893 = vmul.f32 %v828, %v877
          %v894 = vmul.f32 %v829, %v878
          %v895 = vmul.f32 %v830, %v879
          %v896 = vmul.f32 %v831, %v880
          %v897 = vmul.f32 %v832, %v881
          %v898 = vmul.f32 %v833, %v882
          %v899 = vmul.f32 %v834, %v883
          %v900 = vmul.f32 %v835, %v884
          %v901 = vmul.f32 %v836, %v885
          %v902 = vmul.f32 %v837, %v886
          %v903 = vmul.f32 %v838, %v887
          %v904 = vmul.f32 %v839, %v888
          %v905 = vmul.f32 %v840, %v889
          %v906 = vmul.f32 %v841, %v890
          %v907 = vmul.f32 %v842, %v891
          %v908 = vadd.f32 %v892, %v893
          %v909 = vadd.f32 %v908, %v894
          %v910 = vadd.f32 %v909, %v895
          %v911 = vadd.f32 %v910, %v896
          %v912 = vadd.f32 %v911, %v897
          %v913 = vadd.f32 %v912, %v898
          %v914 = vadd.f32 %v913, %v899
          %v915 = vadd.f32 %v914, %v900
          %v916 = vadd.f32 %v915, %v901
          %v917 = vadd.f32 %v916, %v902
          %v918 = vadd.f32 %v917, %v903
          %v919 = vadd.f32 %v918, %v904
          %v920 = vadd.f32 %v919, %v905
          %v921 = vadd.f32 %v920, %v906
          %v922 = vadd.f32 %v921, %v907
          %923 = vadd.xlane.f32.xlu0 %v922
          %v924 = vpop.xlane.xlu0 %923
          %v925 = vrot.slane %v924, 4
          %v926 = vadd.f32 %v924, %v925
          %v927 = vrot.slane %v926, 2
          %v928 = vadd.f32 %v926, %v927
          %v929 = vrot.slane %v928, 1
          %v930 = vadd.f32 %v928, %v929
          %s931 = vtos %v930
          %vm932 = vcmp.eq.s32.totalorder %v497, 3
          %v933 = vstv %s931
          %v934 = vsel %vm932, %v933, 0.0
          %v935 = vadd.f32 %v825, %v934
          %s936 = scalar_lea.vmem %s420, 512 [#allocation10]
          %v937 = vld [vmem:[%s936] sm:$0xff]
          %v938 = vld [vmem:[%s936 + $0x8] sm:$0xff]
          %v939 = vld [vmem:[%s936 + $0x10] sm:$0xff]
          %v940 = vld [vmem:[%s936 + $0x18] sm:$0xff]
          %v941 = vld [vmem:[%s936 + $0x20] sm:$0xff]
          %v942 = vld [vmem:[%s936 + $0x28] sm:$0xff]
          %v943 = vld [vmem:[%s936 + $0x30] sm:$0xff]
          %v944 = vld [vmem:[%s936 + $0x38] sm:$0xff]
          %v945 = vld [vmem:[%s936 + $0x40] sm:$0xff]
          %v946 = vld [vmem:[%s936 + $0x48] sm:$0xff]
          %v947 = vld [vmem:[%s936 + $0x50] sm:$0xff]
          %v948 = vld [vmem:[%s936 + $0x58] sm:$0xff]
          %v949 = vld [vmem:[%s936 + $0x60] sm:$0xff]
          %v950 = vld [vmem:[%s936 + $0x68] sm:$0xff]
          %v951 = vld [vmem:[%s936 + $0x70] sm:$0xff]
          %v952 = vld [vmem:[%s936 + $0x78] sm:$0xff]
          %s953 = scalar_lea.vmem %s429, 512 [#allocation11]
          %v954 = vld [vmem:[%s953] sm:$0xff]
          %v955 = vld [vmem:[%s953 + $0x8] sm:$0xff]
          %v956 = vld [vmem:[%s953 + $0x10] sm:$0xff]
          %v957 = vld [vmem:[%s953 + $0x18] sm:$0xff]
          %v958 = vld [vmem:[%s953 + $0x20] sm:$0xff]
          %v959 = vld [vmem:[%s953 + $0x28] sm:$0xff]
          %v960 = vld [vmem:[%s953 + $0x30] sm:$0xff]
          %v961 = vld [vmem:[%s953 + $0x38] sm:$0xff]
          %v962 = vld [vmem:[%s953 + $0x40] sm:$0xff]
          %v963 = vld [vmem:[%s953 + $0x48] sm:$0xff]
          %v964 = vld [vmem:[%s953 + $0x50] sm:$0xff]
          %v965 = vld [vmem:[%s953 + $0x58] sm:$0xff]
          %v966 = vld [vmem:[%s953 + $0x60] sm:$0xff]
          %v967 = vld [vmem:[%s953 + $0x68] sm:$0xff]
          %v968 = vld [vmem:[%s953 + $0x70] sm:$0xff]
          %v969 = vld [vmem:[%s953 + $0x78] sm:$0xff]
          %970 = vxpose.xlu0.b32.start [1/16] %v954, 128
          %971 = vxpose.xlu0.b32.cont [2/16] %v955, 128
          %972 = vxpose.xlu0.b32.cont [3/16] %v956, 128
          %973 = vxpose.xlu0.b32.cont [4/16] %v957, 128
          %974 = vxpose.xlu0.b32.cont [5/16] %v958, 128
          %975 = vxpose.xlu0.b32.cont [6/16] %v959, 128
          %976 = vxpose.xlu0.b32.cont [7/16] %v960, 128
          %977 = vxpose.xlu0.b32.cont [8/16] %v961, 128
          %978 = vxpose.xlu0.b32.cont [9/16] %v962, 128
          %979 = vxpose.xlu0.b32.cont [10/16] %v963, 128
          %980 = vxpose.xlu0.b32.cont [11/16] %v964, 128
          %981 = vxpose.xlu0.b32.cont [12/16] %v965, 128
          %982 = vxpose.xlu0.b32.cont [13/16] %v966, 128
          %983 = vxpose.xlu0.b32.cont [14/16] %v967, 128
          %984 = vxpose.xlu0.b32.cont [15/16] %v968, 128
          %985 = vxpose.xlu0.b32.end [16/16] %v969, 128
          %v986 = vpop.trf.xlu0
          %v987 = vpop.trf.xlu0
          %v988 = vpop.trf.xlu0
          %v989 = vpop.trf.xlu0
          %v990 = vpop.trf.xlu0
          %v991 = vpop.trf.xlu0
          %v992 = vpop.trf.xlu0
          %v993 = vpop.trf.xlu0
          %v994 = vpop.trf.xlu0
          %v995 = vpop.trf.xlu0
          %v996 = vpop.trf.xlu0
          %v997 = vpop.trf.xlu0
          %v998 = vpop.trf.xlu0
          %v999 = vpop.trf.xlu0
          %v1000 = vpop.trf.xlu0
          %v1001 = vpop.trf.xlu0
          %v1002 = vmul.f32 %v937, %v986
          %v1003 = vmul.f32 %v938, %v987
          %v1004 = vmul.f32 %v939, %v988
          %v1005 = vmul.f32 %v940, %v989
          %v1006 = vmul.f32 %v941, %v990
          %v1007 = vmul.f32 %v942, %v991
          %v1008 = vmul.f32 %v943, %v992
          %v1009 = vmul.f32 %v944, %v993
          %v1010 = vmul.f32 %v945, %v994
          %v1011 = vmul.f32 %v946, %v995
          %v1012 = vmul.f32 %v947, %v996
          %v1013 = vmul.f32 %v948, %v997
          %v1014 = vmul.f32 %v949, %v998
          %v1015 = vmul.f32 %v950, %v999
          %v1016 = vmul.f32 %v951, %v1000
          %v1017 = vmul.f32 %v952, %v1001
          %v1018 = vadd.f32 %v1002, %v1003
          %v1019 = vadd.f32 %v1018, %v1004
          %v1020 = vadd.f32 %v1019, %v1005
          %v1021 = vadd.f32 %v1020, %v1006
          %v1022 = vadd.f32 %v1021, %v1007
          %v1023 = vadd.f32 %v1022, %v1008
          %v1024 = vadd.f32 %v1023, %v1009
          %v1025 = vadd.f32 %v1024, %v1010
          %v1026 = vadd.f32 %v1025, %v1011
          %v1027 = vadd.f32 %v1026, %v1012
          %v1028 = vadd.f32 %v1027, %v1013
          %v1029 = vadd.f32 %v1028, %v1014
          %v1030 = vadd.f32 %v1029, %v1015
          %v1031 = vadd.f32 %v1030, %v1016
          %v1032 = vadd.f32 %v1031, %v1017
          %1033 = vadd.xlane.f32.xlu0 %v1032
          %v1034 = vpop.xlane.xlu0 %1033
          %v1035 = vrot.slane %v1034, 4
          %v1036 = vadd.f32 %v1034, %v1035
          %v1037 = vrot.slane %v1036, 2
          %v1038 = vadd.f32 %v1036, %v1037
          %v1039 = vrot.slane %v1038, 1
          %v1040 = vadd.f32 %v1038, %v1039
          %s1041 = vtos %v1040
          %vm1042 = vcmp.eq.s32.totalorder %v497, 4
          %v1043 = vstv %s1041
          %v1044 = vsel %vm1042, %v1043, 0.0
          %v1045 = vadd.f32 %v935, %v1044
          %s1046 = scalar_lea.vmem %s420, 640 [#allocation10]
          %v1047 = vld [vmem:[%s1046] sm:$0xff]
          %v1048 = vld [vmem:[%s1046 + $0x8] sm:$0xff]
          %v1049 = vld [vmem:[%s1046 + $0x10] sm:$0xff]
          %v1050 = vld [vmem:[%s1046 + $0x18] sm:$0xff]
          %v1051 = vld [vmem:[%s1046 + $0x20] sm:$0xff]
          %v1052 = vld [vmem:[%s1046 + $0x28] sm:$0xff]
          %v1053 = vld [vmem:[%s1046 + $0x30] sm:$0xff]
          %v1054 = vld [vmem:[%s1046 + $0x38] sm:$0xff]
          %v1055 = vld [vmem:[%s1046 + $0x40] sm:$0xff]
          %v1056 = vld [vmem:[%s1046 + $0x48] sm:$0xff]
          %v1057 = vld [vmem:[%s1046 + $0x50] sm:$0xff]
          %v1058 = vld [vmem:[%s1046 + $0x58] sm:$0xff]
          %v1059 = vld [vmem:[%s1046 + $0x60] sm:$0xff]
          %v1060 = vld [vmem:[%s1046 + $0x68] sm:$0xff]
          %v1061 = vld [vmem:[%s1046 + $0x70] sm:$0xff]
          %v1062 = vld [vmem:[%s1046 + $0x78] sm:$0xff]
          %s1063 = scalar_lea.vmem %s429, 640 [#allocation11]
          %v1064 = vld [vmem:[%s1063] sm:$0xff]
          %v1065 = vld [vmem:[%s1063 + $0x8] sm:$0xff]
          %v1066 = vld [vmem:[%s1063 + $0x10] sm:$0xff]
          %v1067 = vld [vmem:[%s1063 + $0x18] sm:$0xff]
          %v1068 = vld [vmem:[%s1063 + $0x20] sm:$0xff]
          %v1069 = vld [vmem:[%s1063 + $0x28] sm:$0xff]
          %v1070 = vld [vmem:[%s1063 + $0x30] sm:$0xff]
          %v1071 = vld [vmem:[%s1063 + $0x38] sm:$0xff]
          %v1072 = vld [vmem:[%s1063 + $0x40] sm:$0xff]
          %v1073 = vld [vmem:[%s1063 + $0x48] sm:$0xff]
          %v1074 = vld [vmem:[%s1063 + $0x50] sm:$0xff]
          %v1075 = vld [vmem:[%s1063 + $0x58] sm:$0xff]
          %v1076 = vld [vmem:[%s1063 + $0x60] sm:$0xff]
          %v1077 = vld [vmem:[%s1063 + $0x68] sm:$0xff]
          %v1078 = vld [vmem:[%s1063 + $0x70] sm:$0xff]
          %v1079 = vld [vmem:[%s1063 + $0x78] sm:$0xff]
          %1080 = vxpose.xlu0.b32.start [1/16] %v1064, 128
          %1081 = vxpose.xlu0.b32.cont [2/16] %v1065, 128
          %1082 = vxpose.xlu0.b32.cont [3/16] %v1066, 128
          %1083 = vxpose.xlu0.b32.cont [4/16] %v1067, 128
          %1084 = vxpose.xlu0.b32.cont [5/16] %v1068, 128
          %1085 = vxpose.xlu0.b32.cont [6/16] %v1069, 128
          %1086 = vxpose.xlu0.b32.cont [7/16] %v1070, 128
          %1087 = vxpose.xlu0.b32.cont [8/16] %v1071, 128
          %1088 = vxpose.xlu0.b32.cont [9/16] %v1072, 128
          %1089 = vxpose.xlu0.b32.cont [10/16] %v1073, 128
          %1090 = vxpose.xlu0.b32.cont [11/16] %v1074, 128
          %1091 = vxpose.xlu0.b32.cont [12/16] %v1075, 128
          %1092 = vxpose.xlu0.b32.cont [13/16] %v1076, 128
          %1093 = vxpose.xlu0.b32.cont [14/16] %v1077, 128
          %1094 = vxpose.xlu0.b32.cont [15/16] %v1078, 128
          %1095 = vxpose.xlu0.b32.end [16/16] %v1079, 128
          %v1096 = vpop.trf.xlu0
          %v1097 = vpop.trf.xlu0
          %v1098 = vpop.trf.xlu0
          %v1099 = vpop.trf.xlu0
          %v1100 = vpop.trf.xlu0
          %v1101 = vpop.trf.xlu0
          %v1102 = vpop.trf.xlu0
          %v1103 = vpop.trf.xlu0
          %v1104 = vpop.trf.xlu0
          %v1105 = vpop.trf.xlu0
          %v1106 = vpop.trf.xlu0
          %v1107 = vpop.trf.xlu0
          %v1108 = vpop.trf.xlu0
          %v1109 = vpop.trf.xlu0
          %v1110 = vpop.trf.xlu0
          %v1111 = vpop.trf.xlu0
          %v1112 = vmul.f32 %v1047, %v1096
          %v1113 = vmul.f32 %v1048, %v1097
          %v1114 = vmul.f32 %v1049, %v1098
          %v1115 = vmul.f32 %v1050, %v1099
          %v1116 = vmul.f32 %v1051, %v1100
          %v1117 = vmul.f32 %v1052, %v1101
          %v1118 = vmul.f32 %v1053, %v1102
          %v1119 = vmul.f32 %v1054, %v1103
          %v1120 = vmul.f32 %v1055, %v1104
          %v1121 = vmul.f32 %v1056, %v1105
          %v1122 = vmul.f32 %v1057, %v1106
          %v1123 = vmul.f32 %v1058, %v1107
          %v1124 = vmul.f32 %v1059, %v1108
          %v1125 = vmul.f32 %v1060, %v1109
          %v1126 = vmul.f32 %v1061, %v1110
          %v1127 = vmul.f32 %v1062, %v1111
          %v1128 = vadd.f32 %v1112, %v1113
          %v1129 = vadd.f32 %v1128, %v1114
          %v1130 = vadd.f32 %v1129, %v1115
          %v1131 = vadd.f32 %v1130, %v1116
          %v1132 = vadd.f32 %v1131, %v1117
          %v1133 = vadd.f32 %v1132, %v1118
          %v1134 = vadd.f32 %v1133, %v1119
          %v1135 = vadd.f32 %v1134, %v1120
          %v1136 = vadd.f32 %v1135, %v1121
          %v1137 = vadd.f32 %v1136, %v1122
          %v1138 = vadd.f32 %v1137, %v1123
          %v1139 = vadd.f32 %v1138, %v1124
          %v1140 = vadd.f32 %v1139, %v1125
          %v1141 = vadd.f32 %v1140, %v1126
          %v1142 = vadd.f32 %v1141, %v1127
          %1143 = vadd.xlane.f32.xlu0 %v1142
          %v1144 = vpop.xlane.xlu0 %1143
          %v1145 = vrot.slane %v1144, 4
          %v1146 = vadd.f32 %v1144, %v1145
          %v1147 = vrot.slane %v1146, 2
          %v1148 = vadd.f32 %v1146, %v1147
          %v1149 = vrot.slane %v1148, 1
          %v1150 = vadd.f32 %v1148, %v1149
          %s1151 = vtos %v1150
          %vm1152 = vcmp.eq.s32.totalorder %v497, 5
          %v1153 = vstv %s1151
          %v1154 = vsel %vm1152, %v1153, 0.0
          %v1155 = vadd.f32 %v1045, %v1154
          %s1156 = scalar_lea.vmem %s420, 768 [#allocation10]
          %v1157 = vld [vmem:[%s1156] sm:$0xff]
          %v1158 = vld [vmem:[%s1156 + $0x8] sm:$0xff]
          %v1159 = vld [vmem:[%s1156 + $0x10] sm:$0xff]
          %v1160 = vld [vmem:[%s1156 + $0x18] sm:$0xff]
          %v1161 = vld [vmem:[%s1156 + $0x20] sm:$0xff]
          %v1162 = vld [vmem:[%s1156 + $0x28] sm:$0xff]
          %v1163 = vld [vmem:[%s1156 + $0x30] sm:$0xff]
          %v1164 = vld [vmem:[%s1156 + $0x38] sm:$0xff]
          %v1165 = vld [vmem:[%s1156 + $0x40] sm:$0xff]
          %v1166 = vld [vmem:[%s1156 + $0x48] sm:$0xff]
          %v1167 = vld [vmem:[%s1156 + $0x50] sm:$0xff]
          %v1168 = vld [vmem:[%s1156 + $0x58] sm:$0xff]
          %v1169 = vld [vmem:[%s1156 + $0x60] sm:$0xff]
          %v1170 = vld [vmem:[%s1156 + $0x68] sm:$0xff]
          %v1171 = vld [vmem:[%s1156 + $0x70] sm:$0xff]
          %v1172 = vld [vmem:[%s1156 + $0x78] sm:$0xff]
          %s1173 = scalar_lea.vmem %s429, 768 [#allocation11]
          %v1174 = vld [vmem:[%s1173] sm:$0xff]
          %v1175 = vld [vmem:[%s1173 + $0x8] sm:$0xff]
          %v1176 = vld [vmem:[%s1173 + $0x10] sm:$0xff]
          %v1177 = vld [vmem:[%s1173 + $0x18] sm:$0xff]
          %v1178 = vld [vmem:[%s1173 + $0x20] sm:$0xff]
          %v1179 = vld [vmem:[%s1173 + $0x28] sm:$0xff]
          %v1180 = vld [vmem:[%s1173 + $0x30] sm:$0xff]
          %v1181 = vld [vmem:[%s1173 + $0x38] sm:$0xff]
          %v1182 = vld [vmem:[%s1173 + $0x40] sm:$0xff]
          %v1183 = vld [vmem:[%s1173 + $0x48] sm:$0xff]
          %v1184 = vld [vmem:[%s1173 + $0x50] sm:$0xff]
          %v1185 = vld [vmem:[%s1173 + $0x58] sm:$0xff]
          %v1186 = vld [vmem:[%s1173 + $0x60] sm:$0xff]
          %v1187 = vld [vmem:[%s1173 + $0x68] sm:$0xff]
          %v1188 = vld [vmem:[%s1173 + $0x70] sm:$0xff]
          %v1189 = vld [vmem:[%s1173 + $0x78] sm:$0xff]
          %1190 = vxpose.xlu0.b32.start [1/16] %v1174, 128
          %1191 = vxpose.xlu0.b32.cont [2/16] %v1175, 128
          %1192 = vxpose.xlu0.b32.cont [3/16] %v1176, 128
          %1193 = vxpose.xlu0.b32.cont [4/16] %v1177, 128
          %1194 = vxpose.xlu0.b32.cont [5/16] %v1178, 128
          %1195 = vxpose.xlu0.b32.cont [6/16] %v1179, 128
          %1196 = vxpose.xlu0.b32.cont [7/16] %v1180, 128
          %1197 = vxpose.xlu0.b32.cont [8/16] %v1181, 128
          %1198 = vxpose.xlu0.b32.cont [9/16] %v1182, 128
          %1199 = vxpose.xlu0.b32.cont [10/16] %v1183, 128
          %1200 = vxpose.xlu0.b32.cont [11/16] %v1184, 128
          %1201 = vxpose.xlu0.b32.cont [12/16] %v1185, 128
          %1202 = vxpose.xlu0.b32.cont [13/16] %v1186, 128
          %1203 = vxpose.xlu0.b32.cont [14/16] %v1187, 128
          %1204 = vxpose.xlu0.b32.cont [15/16] %v1188, 128
          %1205 = vxpose.xlu0.b32.end [16/16] %v1189, 128
          %v1206 = vpop.trf.xlu0
          %v1207 = vpop.trf.xlu0
          %v1208 = vpop.trf.xlu0
          %v1209 = vpop.trf.xlu0
          %v1210 = vpop.trf.xlu0
          %v1211 = vpop.trf.xlu0
          %v1212 = vpop.trf.xlu0
          %v1213 = vpop.trf.xlu0
          %v1214 = vpop.trf.xlu0
          %v1215 = vpop.trf.xlu0
          %v1216 = vpop.trf.xlu0
          %v1217 = vpop.trf.xlu0
          %v1218 = vpop.trf.xlu0
          %v1219 = vpop.trf.xlu0
          %v1220 = vpop.trf.xlu0
          %v1221 = vpop.trf.xlu0
          %v1222 = vmul.f32 %v1157, %v1206
          %v1223 = vmul.f32 %v1158, %v1207
          %v1224 = vmul.f32 %v1159, %v1208
          %v1225 = vmul.f32 %v1160, %v1209
          %v1226 = vmul.f32 %v1161, %v1210
          %v1227 = vmul.f32 %v1162, %v1211
          %v1228 = vmul.f32 %v1163, %v1212
          %v1229 = vmul.f32 %v1164, %v1213
          %v1230 = vmul.f32 %v1165, %v1214
          %v1231 = vmul.f32 %v1166, %v1215
          %v1232 = vmul.f32 %v1167, %v1216
          %v1233 = vmul.f32 %v1168, %v1217
          %v1234 = vmul.f32 %v1169, %v1218
          %v1235 = vmul.f32 %v1170, %v1219
          %v1236 = vmul.f32 %v1171, %v1220
          %v1237 = vmul.f32 %v1172, %v1221
          %v1238 = vadd.f32 %v1222, %v1223
          %v1239 = vadd.f32 %v1238, %v1224
          %v1240 = vadd.f32 %v1239, %v1225
          %v1241 = vadd.f32 %v1240, %v1226
          %v1242 = vadd.f32 %v1241, %v1227
          %v1243 = vadd.f32 %v1242, %v1228
          %v1244 = vadd.f32 %v1243, %v1229
          %v1245 = vadd.f32 %v1244, %v1230
          %v1246 = vadd.f32 %v1245, %v1231
          %v1247 = vadd.f32 %v1246, %v1232
          %v1248 = vadd.f32 %v1247, %v1233
          %v1249 = vadd.f32 %v1248, %v1234
          %v1250 = vadd.f32 %v1249, %v1235
          %v1251 = vadd.f32 %v1250, %v1236
          %v1252 = vadd.f32 %v1251, %v1237
          %1253 = vadd.xlane.f32.xlu0 %v1252
          %v1254 = vpop.xlane.xlu0 %1253
          %v1255 = vrot.slane %v1254, 4
          %v1256 = vadd.f32 %v1254, %v1255
          %v1257 = vrot.slane %v1256, 2
          %v1258 = vadd.f32 %v1256, %v1257
          %v1259 = vrot.slane %v1258, 1
          %v1260 = vadd.f32 %v1258, %v1259
          %s1261 = vtos %v1260
          %vm1262 = vcmp.eq.s32.totalorder %v497, 6
          %v1263 = vstv %s1261
          %v1264 = vsel %vm1262, %v1263, 0.0
          %v1265 = vadd.f32 %v1155, %v1264
          %s1266 = scalar_lea.vmem %s420, 896 [#allocation10]
          %v1267 = vld [vmem:[%s1266] sm:$0xff]
          %v1268 = vld [vmem:[%s1266 + $0x8] sm:$0xff]
          %v1269 = vld [vmem:[%s1266 + $0x10] sm:$0xff]
          %v1270 = vld [vmem:[%s1266 + $0x18] sm:$0xff]
          %v1271 = vld [vmem:[%s1266 + $0x20] sm:$0xff]
          %v1272 = vld [vmem:[%s1266 + $0x28] sm:$0xff]
          %v1273 = vld [vmem:[%s1266 + $0x30] sm:$0xff]
          %v1274 = vld [vmem:[%s1266 + $0x38] sm:$0xff]
          %v1275 = vld [vmem:[%s1266 + $0x40] sm:$0xff]
          %v1276 = vld [vmem:[%s1266 + $0x48] sm:$0xff]
          %v1277 = vld [vmem:[%s1266 + $0x50] sm:$0xff]
          %v1278 = vld [vmem:[%s1266 + $0x58] sm:$0xff]
          %v1279 = vld [vmem:[%s1266 + $0x60] sm:$0xff]
          %v1280 = vld [vmem:[%s1266 + $0x68] sm:$0xff]
          %v1281 = vld [vmem:[%s1266 + $0x70] sm:$0xff]
          %v1282 = vld [vmem:[%s1266 + $0x78] sm:$0xff]
          %s1283 = scalar_lea.vmem %s429, 896 [#allocation11]
          %v1284 = vld [vmem:[%s1283] sm:$0xff]
          %v1285 = vld [vmem:[%s1283 + $0x8] sm:$0xff]
          %v1286 = vld [vmem:[%s1283 + $0x10] sm:$0xff]
          %v1287 = vld [vmem:[%s1283 + $0x18] sm:$0xff]
          %v1288 = vld [vmem:[%s1283 + $0x20] sm:$0xff]
          %v1289 = vld [vmem:[%s1283 + $0x28] sm:$0xff]
          %v1290 = vld [vmem:[%s1283 + $0x30] sm:$0xff]
          %v1291 = vld [vmem:[%s1283 + $0x38] sm:$0xff]
          %v1292 = vld [vmem:[%s1283 + $0x40] sm:$0xff]
          %v1293 = vld [vmem:[%s1283 + $0x48] sm:$0xff]
          %v1294 = vld [vmem:[%s1283 + $0x50] sm:$0xff]
          %v1295 = vld [vmem:[%s1283 + $0x58] sm:$0xff]
          %v1296 = vld [vmem:[%s1283 + $0x60] sm:$0xff]
          %v1297 = vld [vmem:[%s1283 + $0x68] sm:$0xff]
          %v1298 = vld [vmem:[%s1283 + $0x70] sm:$0xff]
          %v1299 = vld [vmem:[%s1283 + $0x78] sm:$0xff]
          %1300 = vxpose.xlu0.b32.start [1/16] %v1284, 128
          %1301 = vxpose.xlu0.b32.cont [2/16] %v1285, 128
          %1302 = vxpose.xlu0.b32.cont [3/16] %v1286, 128
          %1303 = vxpose.xlu0.b32.cont [4/16] %v1287, 128
          %1304 = vxpose.xlu0.b32.cont [5/16] %v1288, 128
          %1305 = vxpose.xlu0.b32.cont [6/16] %v1289, 128
          %1306 = vxpose.xlu0.b32.cont [7/16] %v1290, 128
          %1307 = vxpose.xlu0.b32.cont [8/16] %v1291, 128
          %1308 = vxpose.xlu0.b32.cont [9/16] %v1292, 128
          %1309 = vxpose.xlu0.b32.cont [10/16] %v1293, 128
          %1310 = vxpose.xlu0.b32.cont [11/16] %v1294, 128
          %1311 = vxpose.xlu0.b32.cont [12/16] %v1295, 128
          %1312 = vxpose.xlu0.b32.cont [13/16] %v1296, 128
          %1313 = vxpose.xlu0.b32.cont [14/16] %v1297, 128
          %1314 = vxpose.xlu0.b32.cont [15/16] %v1298, 128
          %1315 = vxpose.xlu0.b32.end [16/16] %v1299, 128
          %v1316 = vpop.trf.xlu0
          %v1317 = vpop.trf.xlu0
          %v1318 = vpop.trf.xlu0
          %v1319 = vpop.trf.xlu0
          %v1320 = vpop.trf.xlu0
          %v1321 = vpop.trf.xlu0
          %v1322 = vpop.trf.xlu0
          %v1323 = vpop.trf.xlu0
          %v1324 = vpop.trf.xlu0
          %v1325 = vpop.trf.xlu0
          %v1326 = vpop.trf.xlu0
          %v1327 = vpop.trf.xlu0
          %v1328 = vpop.trf.xlu0
          %v1329 = vpop.trf.xlu0
          %v1330 = vpop.trf.xlu0
          %v1331 = vpop.trf.xlu0
          %v1332 = vmul.f32 %v1267, %v1316
          %v1333 = vmul.f32 %v1268, %v1317
          %v1334 = vmul.f32 %v1269, %v1318
          %v1335 = vmul.f32 %v1270, %v1319
          %v1336 = vmul.f32 %v1271, %v1320
          %v1337 = vmul.f32 %v1272, %v1321
          %v1338 = vmul.f32 %v1273, %v1322
          %v1339 = vmul.f32 %v1274, %v1323
          %v1340 = vmul.f32 %v1275, %v1324
          %v1341 = vmul.f32 %v1276, %v1325
          %v1342 = vmul.f32 %v1277, %v1326
          %v1343 = vmul.f32 %v1278, %v1327
          %v1344 = vmul.f32 %v1279, %v1328
          %v1345 = vmul.f32 %v1280, %v1329
          %v1346 = vmul.f32 %v1281, %v1330
          %v1347 = vmul.f32 %v1282, %v1331
          %v1348 = vadd.f32 %v1332, %v1333
          %v1349 = vadd.f32 %v1348, %v1334
          %v1350 = vadd.f32 %v1349, %v1335
          %v1351 = vadd.f32 %v1350, %v1336
          %v1352 = vadd.f32 %v1351, %v1337
          %v1353 = vadd.f32 %v1352, %v1338
          %v1354 = vadd.f32 %v1353, %v1339
          %v1355 = vadd.f32 %v1354, %v1340
          %v1356 = vadd.f32 %v1355, %v1341
          %v1357 = vadd.f32 %v1356, %v1342
          %v1358 = vadd.f32 %v1357, %v1343
          %v1359 = vadd.f32 %v1358, %v1344
          %v1360 = vadd.f32 %v1359, %v1345
          %v1361 = vadd.f32 %v1360, %v1346
          %v1362 = vadd.f32 %v1361, %v1347
          %1363 = vadd.xlane.f32.xlu0 %v1362
          %v1364 = vpop.xlane.xlu0 %1363
          %v1365 = vrot.slane %v1364, 4
          %v1366 = vadd.f32 %v1364, %v1365
          %v1367 = vrot.slane %v1366, 2
          %v1368 = vadd.f32 %v1366, %v1367
          %v1369 = vrot.slane %v1368, 1
          %v1370 = vadd.f32 %v1368, %v1369
          %s1371 = vtos %v1370
          %vm1372 = vcmp.eq.s32.totalorder %v497, 7
          %v1373 = vstv %s1371
          %v1374 = vsel %vm1372, %v1373, 0.0
          %v1375 = vadd.f32 %v1265, %v1374
          %v1376 = vmul.f32 %v1375, -0.25
          %vm1377 = vcmask 7168
          %1378 = vst.msk [vmem:[#allocation2] sm:$0xff] %vm1377, %v1376
        $region72: #{custom_mse_loss.1} parent=43 // pred_fallthru
          _
        %v1379 = vld [vmem:[%s384] sm:$0xff]
        %v1380 = vld [vmem:[%s384 + $0x8] sm:$0xff]
        %v1381 = vld [vmem:[%s384 + $0x10] sm:$0xff]
        %v1382 = vld [vmem:[%s384 + $0x18] sm:$0xff]
        %v1383 = vld [vmem:[%s393] sm:$0xff]
        %v1384 = vld [vmem:[%s393 + $0x8] sm:$0xff]
        %v1385 = vld [vmem:[%s393 + $0x10] sm:$0xff]
        %v1386 = vld [vmem:[%s393 + $0x18] sm:$0xff]
        %v1387 = vadd.f32 %v1379, %v1383
        %v1388 = vadd.f32 %v1380, %v1384
        %v1389 = vadd.f32 %v1381, %v1385
        %v1390 = vadd.f32 %v1382, %v1386
        %v1391 = vld [vmem:[%s402] sm:$0xff]
        %v1392 = vld [vmem:[%s402 + $0x8] sm:$0xff]
        %v1393 = vld [vmem:[%s402 + $0x10] sm:$0xff]
        %v1394 = vld [vmem:[%s402 + $0x18] sm:$0xff]
        %v1395 = vmul.f32 %v1387, %v1391
        %v1396 = vmul.f32 %v1388, %v1392
        %v1397 = vmul.f32 %v1389, %v1393
        %v1398 = vmul.f32 %v1390, %v1394
        %v1399 = vld [vmem:[%s411] sm:$0xff]
        %v1400 = vld [vmem:[%s411 + $0x8] sm:$0xff]
        %v1401 = vld [vmem:[%s411 + $0x10] sm:$0xff]
        %v1402 = vld [vmem:[%s411 + $0x18] sm:$0xff]
        %v1403 = vmul.f32 %v1395, %v1399
        %v1404 = vmul.f32 %v1396, %v1400
        %v1405 = vmul.f32 %v1397, %v1401
        %v1406 = vmul.f32 %v1398, %v1402
        %v1407 = vadd.f32 %v1403, %v1404
        %v1408 = vadd.f32 %v1407, %v1405
        %v1409 = vadd.f32 %v1408, %v1406
        %1410 = vadd.xlane.f32.xlu0 %v1409
        %v1411 = vpop.xlane.xlu0 %1410
        %v1412 = vld [vmem:[#allocation2] sm:$0xff]
        %v1413 = vadd.f32 %v1412, %v1411
        %vm1414 = vcmask 7168
        %1415 = vst.msk [vmem:[#allocation2] sm:$0xff] %vm1414, %v1413
        %p1416 = scmp.eq.s32.totalorder %s34, 1
        // Predicated region
        $region73: #{custom_mse_loss.1} parent=43 // pred_check
          %p1417 = pneg %p1416
        $region74: #{custom_mse_loss.1} parent=43 // pred_check_branch
          %1419 = sbr.rel (%p1417) target = $region76
        $region75: #{custom_mse_loss.1} parent=43 // pred_region
          %v1420 = vld [vmem:[#allocation2] sm:$0xff]
          %1422 = vset.pattern.permute.xlu0 0
          %1423 = vperm.xlu0 %1422, %v1420
          %v1424 = vpop.permute.xlu0 %1423
          %1426 = vst [vmem:[%s491] sm:$0xff] %v1424
        $region76: #{custom_mse_loss.1} parent=43 // pred_fallthru
          _
        %p1427 = scmp.lt.s32.totalorder %s33, 1
        %s1428 = scalar_select %p1427, %s33, 1
        %s1429 = smul.addr %s1428, 8
        %s1430 = scalar_lea.vmem %s6, %s1429
        // Predicated region
        $region77: #{custom_mse_loss.1} parent=43 // pred_check
          %p1431 = pneg %p223
        $region78: #{custom_mse_loss.1} parent=43 // pred_check_branch
          %1433 = sbr.rel (%p1431) target = $region80
        $region79: #{custom_mse_loss.1} parent=43 // pred_region
          _
        $region80: #{custom_mse_loss.1} parent=43 // pred_fallthru
          _
      $region44: #{custom_mse_loss.1} parent=5 // pred_fallthru
        _
      %p1434 = scmp.le.s32.totalorder 2, %s24
      // Predicated region
      $region81: #{custom_mse_loss.1} parent=5 // pred_check
        %p1435 = pneg %p1434
      $region82: #{custom_mse_loss.1} parent=5 // pred_check_branch
        %1437 = sbr.rel (%p1435) target = $region84
      $region83: #{custom_mse_loss.1} parent=5 // pred_region
        %s1438 = ssub.s32 %s24, 2
        // Predicated region
        $region85: #{custom_mse_loss.1} parent=83 // pred_check
          %p1439 = pneg %p229
        $region86: #{custom_mse_loss.1} parent=83 // pred_check_branch
          %1441 = sbr.rel (%p1439) target = $region88
        $region87: #{custom_mse_loss.1} parent=83 // pred_region
          %p1442 = scmp.lt.s32.totalorder %s35, 1
          %s1443 = scalar_select %p1442, %s35, 1
          %s1444 = smul.addr %s1443, 8
          %s1445 = scalar_lea.vmem %s6, %s1444
        $region88: #{custom_mse_loss.1} parent=83 // pred_fallthru
          _
      $region84: #{custom_mse_loss.1} parent=5 // pred_fallthru
        _
    $region6: #{custom_mse_loss.1} parent=1 // loop_footer
      %s28 = sadd.s32 1, %s24
    $region7: #{custom_mse_loss.1} parent=1 // loop_footer_branch
      %23 = sbr.rel target = $region3
    $region8: #{custom_mse_loss.1} parent=1 // loop_exit
      _
    %1446 = vsyncpa [#allocation4], 1
    %s1447 = scalar_lea.sflag [#allocation4], 1
    %1448 = vsyncpa %s1447, 1
    %1449 = vsyncpa [#allocation6], 1
    %s1450 = scalar_lea.sflag [#allocation6], 1
    %1451 = vsyncpa %s1450, 1
    %1452 = vsyncpa [#allocation9], 1
    %s1453 = scalar_lea.sflag [#allocation9], 1
    %1454 = vsyncpa %s1453, 1
    %1455 = vsyncpa [#allocation12], 1
    %s1456 = scalar_lea.sflag [#allocation12], 1
    %1457 = vsyncpa %s1456, 1

</llo_original>
